<compile_context>
chip_gen: v7x
topology: tpu7x:2x2x1
jax: 0.10.0
libtpu: 0.0.40
codegen_flags: <defaults>
</compile_context>

<pallas_src>
import functools

import jax
import jax.numpy as jnp
from jax.experimental import pallas as pl
from jax.experimental.pallas import tpu as pltpu


def _round_up(x, m):
    return (x + m - 1) // m * m


def _vmem_capacity_bytes():
    """Per-TensorCore VMEM capacity; conservative fallback if query fails."""
    try:
        info = pltpu.get_tpu_info()
        for attr in ("vmem_capacity_bytes", "vmem_bytes", "vmem_size_bytes"):
            v = getattr(info, attr, None)
            if v:
                return int(v)
    except Exception:
        pass
    return 64 * 1024 * 1024   # v7x per-TC VMEM (smallest of v5e/v6e/v7x)


def mip_head_kernel(segs_l_ref, segs_r_ref,
                    first_l_ref, last_l_ref, first_r_ref, last_r_ref,
                    w_mip_ref, b_mip_ref, w_fc_ref, b_fc_ref,
                    out_ref,
                    acc_l, acc_r,
                    *, seq_len, seq_tile, inv_scale, has_seq_tail):
    s = pl.program_id(1)

    # ---- init accumulators on the first seq tile ---------------------------
    @pl.when(s == 0)
    def _():
        acc_l[...] = jnp.zeros_like(acc_l)
        acc_r[...] = jnp.zeros_like(acc_r)

    # ---- streamed masked-sum over this (TB, TS, D) tile ---------------------
    segs_l = segs_l_ref[...]                                  # [TB, TS] int32
    segs_r = segs_r_ref[...]
    tar_l = segs_l == 1
    tar_r = segs_r == 1
    pos_r = segs_r == 3

    first_l = first_l_ref[...]
    last_l = last_l_ref[...]
    first_r = first_r_ref[...]
    last_r = last_r_ref[...]

    if has_seq_tail:
        # Static (trace-time) branch: only emitted when the seq tile does not
        # divide S.  Zeroes out-of-range positions so stale VMEM (possibly
        # NaN bit patterns) can never reach the accumulators.
        tb, ts = segs_l.shape
        pos_idx = jax.lax.broadcasted_iota(jnp.int32, (tb, ts), 1) + s * seq_tile
        valid = pos_idx < seq_len                             # [TB, TS] bool
        tar_l = jnp.logical_and(tar_l, valid)
        tar_r = jnp.logical_and(tar_r, valid)
        pos_r = jnp.logical_and(pos_r, valid)
        v3 = valid[:, :, None]
        zero = jnp.zeros((), first_l.dtype)
        first_l = jnp.where(v3, first_l, zero)
        last_l = jnp.where(v3, last_l, zero)
        first_r = jnp.where(v3, first_r, zero)
        last_r = jnp.where(v3, last_r, zero)

    # {0,1} masks in the hidden dtype: the MXU contraction is then exact
    # (mask * x is either 0 or x) with f32 accumulation.
    mdt = first_l.dtype
    m_l = tar_l.astype(jnp.float32).astype(mdt)[:, None, :]            # [TB,1,TS]
    m_r = jnp.concatenate(
        [tar_r.astype(jnp.float32).astype(mdt)[:, None, :],
         pos_r.astype(jnp.float32).astype(mdt)[:, None, :]], axis=1)   # [TB,2,TS]

    def msum(m, x):
        # batched matmul on the MXU: sum_s m[b,k,s] * x[b,s,d]
        return jnp.einsum('bks,bsd->bkd', m, x,
                          preferred_element_type=jnp.float32)

    # (first + last) and the masked sums fold into the MXU contractions; the
    # single 0.5/S scale is applied once in the epilogue.
    acc_l[...] += msum(m_l, first_l) + msum(m_l, last_l)      # [TB,1,D]
    acc_r[...] += msum(m_r, first_r) + msum(m_r, last_r)      # [TB,2,D]

    # ---- epilogue: matmuls + output store only on the last seq tile ---------
    @pl.when(s == pl.num_programs(1) - 1)
    def _():
        d = acc_l.shape[-1]
        al = acc_l[...]
        ar = acc_r[...]
        h_t = al[:, 0, :] * inv_scale                         # [TB, D] f32
        h_b = ar[:, 0, :] * inv_scale
        h_p = ar[:, 1, :] * inv_scale
        h_abs = jnp.abs(h_t - h_b)
        h_dot = h_t * h_b

        wdt = w_mip_ref.dtype

        def mm(h, w_ref, row0):
            return jnp.dot(h.astype(wdt), w_ref[pl.ds(row0, d), :],
                           preferred_element_type=jnp.float32)

        # cat_abs_dot + MIP_linear as 4 row-block matmuls over Ref slices
        # (identical to concatenating then one matmul).
        h_mip = (mm(h_t, w_mip_ref, 0 * d)
                 + mm(h_b, w_mip_ref, 1 * d)
                 + mm(h_abs, w_mip_ref, 2 * d)
                 + mm(h_dot, w_mip_ref, 3 * d)
                 + b_mip_ref[...])                            # [1, D] broadcast

        # use_pos: final = cat(h_mip, h_p) @ W_fc + b_fc
        out = (mm(h_mip, w_fc_ref, 0 * d)
               + mm(h_p, w_fc_ref, 1 * d)
               + b_fc_ref[...])                               # [1, C_pad] broadcast
        out_ref[...] = out.astype(out_ref.dtype)


def mip_head(segs_l, segs_r, first_l, last_l, first_r, last_r,
             w_mip, b_mip, w_fc, b_fc, num_classes, *,
             weight_dtype=jnp.bfloat16, max_seq_tile=None, max_batch_tile=8):
    """Pallas wrapper: budget-derived tiles, no padding of the big streams."""
    B, S, D = first_l.shape
    C = num_classes
    C_pad = _round_up(C, 128)         # lane-dense output / fc weight columns
    assert max_batch_tile % 8 == 0

    hid_isz = jnp.dtype(first_l.dtype).itemsize
    w_isz = jnp.dtype(weight_dtype).itemsize

    # --- weights: resident in VMEM (usually bf16); fc padded to C_pad lanes --
    w_mip = w_mip.astype(weight_dtype)                         # [4D, D]
    w_fc = jnp.pad(w_fc, ((0, 0), (0, C_pad - C))).astype(weight_dtype)
    b_mip = b_mip.astype(jnp.float32)                          # [1, D]
    b_fc = jnp.pad(b_fc, ((0, 0), (0, C_pad - C))).astype(jnp.float32)

    # --- batch tile: 8 sublanes (or full batch).  Keeping TB at 8 preserves
    #     n_b >= 2 whenever B > 8 so the 'parallel' axis can shard across the
    #     two v7x TensorCores; we grow the seq tile instead.
    TB = B if B <= max_batch_tile else max_batch_tile

    # --- per-generation VMEM budget and seq-tile selection --------------------
    cap = _vmem_capacity_bytes()
    budget = int(cap * 0.6)

    weight_bytes = 2 * ((4 * D * D + 2 * D * C_pad) * w_isz     # double-buffered
                        + (D + C_pad) * 4)                      # f32 biases
    acc_bytes = TB * 16 * D * 4                                 # sublane-padded accs
    out_bytes = 2 * TB * C_pad * 4
    misc = 2 * 1024 * 1024
    stream_budget = budget - weight_bytes - acc_bytes - out_bytes - misc

    # 4 hidden streams + 2 seg streams, double-buffered, per unit of TS.
    per_ts = 2 * (4 * TB * D * hid_isz + 2 * TB * 4)
    max_ts = max(128, stream_budget // per_ts)
    if max_seq_tile is not None:
        max_ts = min(max_ts, max_seq_tile)

    if S <= max_ts:
        TS = S                          # single seq tile (block == full dim)
    else:
        cap_ts = max(128, (max_ts // 128) * 128)
        TS = None
        for cand in range(cap_ts, 0, -128):   # prefer a divisor of S: no tail path
            if S % cand == 0:
                TS = cand
                break
        if TS is None:
            TS = cap_ts                 # tail block -> kernel masks vs true S
    if TS >= S:
        TS = S
    has_seq_tail = (S % TS) != 0

    n_b = pl.cdiv(B, TB)
    n_s = pl.cdiv(S, TS)

    need = weight_bytes + acc_bytes + out_bytes + misc + per_ts * TS
    vmem_limit = max(32 << 20, min(int(cap * 0.9), need + (4 << 20)))

    # torch.mean divides by the ORIGINAL S; first/last avg contributes 0.5.
    inv_scale = 0.5 / float(S)

    seg_spec = pl.BlockSpec((TB, TS), lambda b, s: (b, s))
    hid_spec = pl.BlockSpec((TB, TS, D), lambda b, s: (b, s, 0))
    # Weights / biases: constant block index -> DMA'd once, stay resident.
    w_mip_spec = pl.BlockSpec((4 * D, D), lambda b, s: (0, 0))
    b_mip_spec = pl.BlockSpec((1, D), lambda b, s: (0, 0))
    w_fc_spec = pl.BlockSpec((2 * D, C_pad), lambda b, s: (0, 0))
    b_fc_spec = pl.BlockSpec((1, C_pad), lambda b, s: (0, 0))

    kernel = functools.partial(mip_head_kernel,
                               seq_len=S, seq_tile=TS,
                               inv_scale=inv_scale,
                               has_seq_tail=has_seq_tail)

    out = pl.pallas_call(
        kernel,
        out_shape=jax.ShapeDtypeStruct((B, C_pad), jnp.float32),
        grid_spec=pltpu.PrefetchScalarGridSpec(
            num_scalar_prefetch=0,
            grid=(n_b, n_s),
            in_specs=[seg_spec, seg_spec,
                      hid_spec, hid_spec, hid_spec, hid_spec,
                      w_mip_spec, b_mip_spec, w_fc_spec, b_fc_spec],
            out_specs=pl.BlockSpec((TB, C_pad), lambda b, s: (b, 0)),
            scratch_shapes=[pltpu.VMEM((TB, 1, D), jnp.float32),
                            pltpu.VMEM((TB, 2, D), jnp.float32)]),
        compiler_params=pltpu.CompilerParams(
            dimension_semantics=("parallel", "arbitrary"),
            vmem_limit_bytes=int(vmem_limit)),
    )(segs_l, segs_r, first_l, last_l, first_r, last_r,
      w_mip, b_mip, w_fc, b_fc)

    return out[:, :C]


def mip_head_ref(segs_l, segs_r, first_l, last_l, first_r, last_r,
                 w_mip, b_mip, w_fc, b_fc):
    """Pure-JAX reference mirroring the PyTorch forward (eval mode, f32)."""
    f32 = lambda x: x.astype(jnp.float32)
    embed_l = (f32(first_l) + f32(last_l)) / 2.0
    embed_r = (f32(first_r) + f32(last_r)) / 2.0
    tar_mask_l = (segs_l == 1).astype(jnp.float32)[:, :, None]
    tar_mask_r = (segs_r == 1).astype(jnp.float32)[:, :, None]
    h_t = jnp.mean(tar_mask_l * embed_l, axis=1)
    h_b = jnp.mean(tar_mask_r * embed_r, axis=1)
    h_mip = jnp.concatenate([h_t, h_b, jnp.abs(h_t - h_b), h_t * h_b], axis=-1)
    h_mip = h_mip @ w_mip + b_mip[0]
    pos_mask = (segs_r == 3).astype(jnp.float32)[:, :, None]
    h_p = jnp.mean(pos_mask * embed_r, axis=1)
    final = jnp.concatenate([h_mip, h_p], axis=-1)
    return final @ w_fc + b_fc[0]


def _run_case(key, *, B, S, D, C, hidden_dtype, weight_dtype,
              max_seq_tile, atol, rtol):
    initializer_range = 0.02   # BERT-style init (self.plm_config.initializer_range)
    keys = jax.random.split(key, 10)

    # PLM hidden-state stand-ins: hidden_states[1] and hidden_states[-1].
    first_l = jax.random.normal(keys[0], (B, S, D), jnp.float32).astype(hidden_dtype)
    last_l = jax.random.normal(keys[1], (B, S, D), jnp.float32).astype(hidden_dtype)
    first_r = jax.random.normal(keys[2], (B, S, D), jnp.float32).astype(hidden_dtype)
    last_r = jax.random.normal(keys[3], (B, S, D), jnp.float32).astype(hidden_dtype)

    # Segment ids in {0,1,2,3}: exercises target mask (==1) and pos mask (==3).
    segs_l = jax.random.randint(keys[4], (B, S), 0, 4, dtype=jnp.int32)
    segs_r = jax.random.randint(keys[5], (B, S), 0, 4, dtype=jnp.int32)

    # MIP_linear: Linear(4D -> D); fc: Linear(2D -> C).  Stored as [in, out].
    w_mip = initializer_range * jax.random.normal(keys[6], (4 * D, D), jnp.float32)
    b_mip = 0.1 * jax.random.normal(keys[7], (1, D), jnp.float32)
    w_fc = initializer_range * jax.random.normal(keys[8], (2 * D, C), jnp.float32)
    b_fc = 0.1 * jax.random.normal(keys[9], (1, C), jnp.float32)

    out = mip_head(segs_l, segs_r, first_l, last_l, first_r, last_r,
                   w_mip, b_mip, w_fc, b_fc, num_classes=C,
                   weight_dtype=weight_dtype, max_seq_tile=max_seq_tile)
    out = jax.block_until_ready(out)

    ref = mip_head_ref(segs_l, segs_r, first_l, last_l, first_r, last_r,
                       w_mip, b_mip, w_fc, b_fc)
    assert out.shape == (B, C), (out.shape, (B, C))
    assert jnp.allclose(out, ref, atol=atol, rtol=rtol), (
        "mismatch vs reference", float(jnp.max(jnp.abs(out - ref))))


if __name__ == "__main__":
    root = jax.random.PRNGKey(0)
    k0, k1, k2 = jax.random.split(root, 3)

    # Case 1: tiny shapes, f32 hidden + f32 weights, single-tile grid path.
    _run_case(k0, B=2, S=8, D=32, C=4,
              hidden_dtype=jnp.float32, weight_dtype=jnp.float32,
              max_seq_tile=None, atol=1e-4, rtol=1e-3)

    # Case 2: bf16 hidden + bf16 resident weights, batch tail (B=12, TB=8),
    # forced multi-seq-tile grid with TS dividing S (no tail masking path).
    _run_case(k1, B=12, S=384, D=128, C=4,
              hidden_dtype=jnp.bfloat16, weight_dtype=jnp.bfloat16,
              max_seq_tile=128, atol=2e-3, rtol=2e-2)

    # Case 3: seq tail (S=200 not a multiple of TS=128) + batch tail, exercising
    # the in-kernel iota validity mask / hidden sanitization path.
    _run_case(k2, B=10, S=200, D=128, C=6,
              hidden_dtype=jnp.bfloat16, weight_dtype=jnp.bfloat16,
              max_seq_tile=128, atol=2e-3, rtol=2e-2)

    print("KERNEL_OK")
</pallas_src>

<mosaic_0001>
module attributes {stable_mosaic.version = 11 : i64} {
  func.func @mip_head_kernel(%arg0: i32, %arg1: i32, %arg2: memref<2x8xi32, #tpu.memory_space<vmem>>, %arg3: memref<2x8xi32, #tpu.memory_space<vmem>>, %arg4: memref<2x8x32xf32, #tpu.memory_space<vmem>>, %arg5: memref<2x8x32xf32, #tpu.memory_space<vmem>>, %arg6: memref<2x8x32xf32, #tpu.memory_space<vmem>>, %arg7: memref<2x8x32xf32, #tpu.memory_space<vmem>>, %arg8: memref<128x32xf32, #tpu.memory_space<vmem>>, %arg9: memref<1x32xf32, #tpu.memory_space<vmem>>, %arg10: memref<64x128xf32, #tpu.memory_space<vmem>>, %arg11: memref<1x128xf32, #tpu.memory_space<vmem>>, %arg12: memref<2x128xf32, #tpu.memory_space<vmem>>, %arg13: memref<2x1x32xf32, #tpu.memory_space<vmem>>, %arg14: memref<2x2x32xf32, #tpu.memory_space<vmem>>) attributes {dimension_semantics = [#tpu.dimension_semantics<parallel>, #tpu.dimension_semantics<arbitrary>], iteration_bounds = array<i64: 1, 1>, scalar_prefetch = 0 : i64, scratch_operands = 2 : i64, tpu.core_type = #tpu.core_type<tc>, window_params = [{transform_indices = @transform_0, window_bounds = array<i64: 2, 8>}, {transform_indices = @transform_1, window_bounds = array<i64: 2, 8>}, {transform_indices = @transform_2, window_bounds = array<i64: 2, 8, 32>}, {transform_indices = @transform_3, window_bounds = array<i64: 2, 8, 32>}, {transform_indices = @transform_4, window_bounds = array<i64: 2, 8, 32>}, {transform_indices = @transform_5, window_bounds = array<i64: 2, 8, 32>}, {pipeline_mode = #tpu.pipeline_mode<synchronous>, transform_indices = @transform_6, window_bounds = array<i64: 128, 32>}, {pipeline_mode = #tpu.pipeline_mode<synchronous>, transform_indices = @transform_7, window_bounds = array<i64: 1, 32>}, {pipeline_mode = #tpu.pipeline_mode<synchronous>, transform_indices = @transform_8, window_bounds = array<i64: 64, 128>}, {pipeline_mode = #tpu.pipeline_mode<synchronous>, transform_indices = @transform_9, window_bounds = array<i64: 1, 128>}, {transform_indices = @transform_10, window_bounds = array<i64: 2, 128>}]} {
    %c0_i32 = arith.constant 0 : i32
    %0 = arith.cmpi eq, %arg1, %c0_i32 : i32
    %1 = arith.extui %0 : i1 to i32
    %c0_i32_0 = arith.constant 0 : i32
    %2 = arith.cmpi ne, %1, %c0_i32_0 : i32
    scf.if %2 {
      %cst_34 = arith.constant 0.000000e+00 : f32
      %40 = vector.broadcast %cst_34 : f32 to vector<2x1x32xf32>
      %c0_35 = arith.constant 0 : index
      %c0_36 = arith.constant 0 : index
      %c0_37 = arith.constant 0 : index
      %41 = vector.load %arg13[%c0_35, %c0_36, %c0_37] : memref<2x1x32xf32, #tpu.memory_space<vmem>>, vector<2x1x32xf32>
      tpu.vector_store %arg13[%c0_35, %c0_36, %c0_37], %40 {strides = array<i32>} : memref<2x1x32xf32, #tpu.memory_space<vmem>>, vector<2x1x32xf32>,
      %cst_38 = arith.constant 0.000000e+00 : f32
      %42 = vector.broadcast %cst_38 : f32 to vector<2x2x32xf32>
      %c0_39 = arith.constant 0 : index
      %c0_40 = arith.constant 0 : index
      %c0_41 = arith.constant 0 : index
      %43 = vector.load %arg14[%c0_39, %c0_40, %c0_41] : memref<2x2x32xf32, #tpu.memory_space<vmem>>, vector<2x2x32xf32>
      tpu.vector_store %arg14[%c0_39, %c0_40, %c0_41], %42 {strides = array<i32>} : memref<2x2x32xf32, #tpu.memory_space<vmem>>, vector<2x2x32xf32>,
    } else {
    }
    %c0 = arith.constant 0 : index
    %c0_1 = arith.constant 0 : index
    %3 = vector.load %arg2[%c0, %c0_1] : memref<2x8xi32, #tpu.memory_space<vmem>>, vector<2x8xi32>
    %c0_2 = arith.constant 0 : index
    %c0_3 = arith.constant 0 : index
    %4 = vector.load %arg3[%c0_2, %c0_3] : memref<2x8xi32, #tpu.memory_space<vmem>>, vector<2x8xi32>
    %c1_i32 = arith.constant 1 : i32
    %5 = vector.broadcast %c1_i32 : i32 to vector<2x8xi32>
    %6 = arith.cmpi eq, %3, %5 : vector<2x8xi32>
    %c1_i32_4 = arith.constant 1 : i32
    %7 = vector.broadcast %c1_i32_4 : i32 to vector<2x8xi32>
    %8 = arith.cmpi eq, %4, %7 : vector<2x8xi32>
    %c3_i32 = arith.constant 3 : i32
    %9 = vector.broadcast %c3_i32 : i32 to vector<2x8xi32>
    %10 = arith.cmpi eq, %4, %9 : vector<2x8xi32>
    %c0_5 = arith.constant 0 : index
    %c0_6 = arith.constant 0 : index
    %c0_7 = arith.constant 0 : index
    %11 = vector.load %arg4[%c0_5, %c0_6, %c0_7] : memref<2x8x32xf32, #tpu.memory_space<vmem>>, vector<2x8x32xf32>
    %c0_8 = arith.constant 0 : index
    %c0_9 = arith.constant 0 : index
    %c0_10 = arith.constant 0 : index
    %12 = vector.load %arg5[%c0_8, %c0_9, %c0_10] : memref<2x8x32xf32, #tpu.memory_space<vmem>>, vector<2x8x32xf32>
    %c0_11 = arith.constant 0 : index
    %c0_12 = arith.constant 0 : index
    %c0_13 = arith.constant 0 : index
    %13 = vector.load %arg6[%c0_11, %c0_12, %c0_13] : memref<2x8x32xf32, #tpu.memory_space<vmem>>, vector<2x8x32xf32>
    %c0_14 = arith.constant 0 : index
    %c0_15 = arith.constant 0 : index
    %c0_16 = arith.constant 0 : index
    %14 = vector.load %arg7[%c0_14, %c0_15, %c0_16] : memref<2x8x32xf32, #tpu.memory_space<vmem>>, vector<2x8x32xf32>
    %15 = arith.extui %6 : vector<2x8xi1> to vector<2x8xi32>
    %16 = arith.sitofp %15 : vector<2x8xi32> to vector<2x8xf32>
    %17 = vector.shape_cast %16 : vector<2x8xf32> to vector<2x1x8xf32>
    %18 = arith.extui %8 : vector<2x8xi1> to vector<2x8xi32>
    %19 = arith.sitofp %18 : vector<2x8xi32> to vector<2x8xf32>
    %20 = vector.shape_cast %19 : vector<2x8xf32> to vector<2x1x8xf32>
    %21 = arith.extui %10 : vector<2x8xi1> to vector<2x8xi32>
    %22 = arith.sitofp %21 : vector<2x8xi32> to vector<2x8xf32>
    %23 = vector.shape_cast %22 : vector<2x8xf32> to vector<2x1x8xf32>
    %24 = tpu.concatenate %20, %23 in 1 : vector<2x1x8xf32>, vector<2x1x8xf32> -> vector<2x2x8xf32>
    %c0_17 = arith.constant 0 : index
    %c0_18 = arith.constant 0 : index
    %c0_19 = arith.constant 0 : index
    %25 = vector.load %arg13[%c0_17, %c0_18, %c0_19] : memref<2x1x32xf32, #tpu.memory_space<vmem>>, vector<2x1x32xf32>
    "tpu.trace_start"() <{level = 10 : i32, message = "bks,bsd->bkd"}> : () -> ()
    %cst = arith.constant dense<0.000000e+00> : vector<2x1x32xf32>
    %26 = tpu.matmul %17, %11, %cst {dimension_numbers = #tpu.dot_dimension_numbers<[2], [1], [1], [2], [0, 0, 0, 1, 1, 2], [0], [0]>} : vector<2x1x8xf32>, vector<2x8x32xf32>, vector<2x1x32xf32> -> vector<2x1x32xf32>
    %cst_20 = arith.constant dense<0.000000e+00> : vector<2x1x32xf32>
    %27 = tpu.matmul %17, %12, %cst_20 {dimension_numbers = #tpu.dot_dimension_numbers<[2], [1], [1], [2], [0, 0, 0, 1, 1, 2], [0], [0]>} : vector<2x1x8xf32>, vector<2x8x32xf32>, vector<2x1x32xf32> -> vector<2x1x32xf32>
    "tpu.trace_stop"() : () -> ()
    %28 = arith.addf %26, %27 : vector<2x1x32xf32>
    %29 = arith.addf %25, %28 : vector<2x1x32xf32>
    %c0_21 = arith.constant 0 : index
    %c0_22 = arith.constant 0 : index
    %c0_23 = arith.constant 0 : index
    %30 = vector.load %arg13[%c0_21, %c0_22, %c0_23] : memref<2x1x32xf32, #tpu.memory_space<vmem>>, vector<2x1x32xf32>
    tpu.vector_store %arg13[%c0_21, %c0_22, %c0_23], %29 {strides = array<i32>} : memref<2x1x32xf32, #tpu.memory_space<vmem>>, vector<2x1x32xf32>,
    %c0_24 = arith.constant 0 : index
    %c0_25 = arith.constant 0 : index
    %c0_26 = arith.constant 0 : index
    %31 = vector.load %arg14[%c0_24, %c0_25, %c0_26] : memref<2x2x32xf32, #tpu.memory_space<vmem>>, vector<2x2x32xf32>
    "tpu.trace_start"() <{level = 10 : i32, message = "bks,bsd->bkd"}> : () -> ()
    %cst_27 = arith.constant dense<0.000000e+00> : vector<2x2x32xf32>
    %32 = tpu.matmul %24, %13, %cst_27 {dimension_numbers = #tpu.dot_dimension_numbers<[2], [1], [1], [2], [0, 0, 0, 1, 1, 2], [0], [0]>} : vector<2x2x8xf32>, vector<2x8x32xf32>, vector<2x2x32xf32> -> vector<2x2x32xf32>
    %cst_28 = arith.constant dense<0.000000e+00> : vector<2x2x32xf32>
    %33 = tpu.matmul %24, %14, %cst_28 {dimension_numbers = #tpu.dot_dimension_numbers<[2], [1], [1], [2], [0, 0, 0, 1, 1, 2], [0], [0]>} : vector<2x2x8xf32>, vector<2x8x32xf32>, vector<2x2x32xf32> -> vector<2x2x32xf32>
    "tpu.trace_stop"() : () -> ()
    %34 = arith.addf %32, %33 : vector<2x2x32xf32>
    %35 = arith.addf %31, %34 : vector<2x2x32xf32>
    %c0_29 = arith.constant 0 : index
    %c0_30 = arith.constant 0 : index
    %c0_31 = arith.constant 0 : index
    %36 = vector.load %arg14[%c0_29, %c0_30, %c0_31] : memref<2x2x32xf32, #tpu.memory_space<vmem>>, vector<2x2x32xf32>
    tpu.vector_store %arg14[%c0_29, %c0_30, %c0_31], %35 {strides = array<i32>} : memref<2x2x32xf32, #tpu.memory_space<vmem>>, vector<2x2x32xf32>,
    %c0_i32_32 = arith.constant 0 : i32
    %37 = arith.cmpi eq, %arg1, %c0_i32_32 : i32
    %38 = arith.extui %37 : i1 to i32
    %c0_i32_33 = arith.constant 0 : i32
    %39 = arith.cmpi ne, %38, %c0_i32_33 : i32
    scf.if %39 {
      %c0_34 = arith.constant 0 : index
      %c0_35 = arith.constant 0 : index
      %c0_36 = arith.constant 0 : index
      %40 = vector.load %arg13[%c0_34, %c0_35, %c0_36] : memref<2x1x32xf32, #tpu.memory_space<vmem>>, vector<2x1x32xf32>
      %c0_37 = arith.constant 0 : index
      %c0_38 = arith.constant 0 : index
      %c0_39 = arith.constant 0 : index
      %41 = vector.load %arg14[%c0_37, %c0_38, %c0_39] : memref<2x2x32xf32, #tpu.memory_space<vmem>>, vector<2x2x32xf32>
      %42 = vector.shape_cast %40 : vector<2x1x32xf32> to vector<2x32xf32>
      %cst_40 = arith.constant 6.250000e-02 : f32
      %43 = vector.broadcast %cst_40 : f32 to vector<2x32xf32>
      %44 = arith.mulf %42, %43 : vector<2x32xf32>
      %45 = vector.extract_strided_slice %41 {offsets = [0, 0, 0], sizes = [2, 1, 32], strides = [1, 1, 1]} : vector<2x2x32xf32> to vector<2x1x32xf32>
      %46 = vector.shape_cast %45 : vector<2x1x32xf32> to vector<2x32xf32>
      %cst_41 = arith.constant 6.250000e-02 : f32
      %47 = vector.broadcast %cst_41 : f32 to vector<2x32xf32>
      %48 = arith.mulf %46, %47 : vector<2x32xf32>
      %49 = vector.extract_strided_slice %41 {offsets = [0, 1, 0], sizes = [2, 1, 32], strides = [1, 1, 1]} : vector<2x2x32xf32> to vector<2x1x32xf32>
      %50 = vector.shape_cast %49 : vector<2x1x32xf32> to vector<2x32xf32>
      %cst_42 = arith.constant 6.250000e-02 : f32
      %51 = vector.broadcast %cst_42 : f32 to vector<2x32xf32>
      %52 = arith.mulf %50, %51 : vector<2x32xf32>
      %53 = arith.subf %44, %48 : vector<2x32xf32>
      %54 = math.absf %53 : vector<2x32xf32>
      %55 = arith.mulf %44, %48 : vector<2x32xf32>
      %c0_43 = arith.constant 0 : index
      %c0_44 = arith.constant 0 : index
      %56 = vector.load %arg8[%c0_43, %c0_44] : memref<128x32xf32, #tpu.memory_space<vmem>>, vector<32x32xf32>
      %cst_45 = arith.constant dense<0.000000e+00> : vector<2x32xf32>
      %57 = tpu.matmul %44, %56, %cst_45 {dimension_numbers = #tpu.dot_dimension_numbers<[1], [0], [0], [1], [0, 0, 1, 1], [], []>} : vector<2x32xf32>, vector<32x32xf32>, vector<2x32xf32> -> vector<2x32xf32>
      %c32 = arith.constant 32 : index
      %c0_46 = arith.constant 0 : index
      %58 = vector.load %arg8[%c32, %c0_46] : memref<128x32xf32, #tpu.memory_space<vmem>>, vector<32x32xf32>
      %cst_47 = arith.constant dense<0.000000e+00> : vector<2x32xf32>
      %59 = tpu.matmul %48, %58, %cst_47 {dimension_numbers = #tpu.dot_dimension_numbers<[1], [0], [0], [1], [0, 0, 1, 1], [], []>} : vector<2x32xf32>, vector<32x32xf32>, vector<2x32xf32> -> vector<2x32xf32>
      %60 = arith.addf %57, %59 : vector<2x32xf32>
      %c64 = arith.constant 64 : index
      %c0_48 = arith.constant 0 : index
      %61 = vector.load %arg8[%c64, %c0_48] : memref<128x32xf32, #tpu.memory_space<vmem>>, vector<32x32xf32>
      %cst_49 = arith.constant dense<0.000000e+00> : vector<2x32xf32>
      %62 = tpu.matmul %54, %61, %cst_49 {dimension_numbers = #tpu.dot_dimension_numbers<[1], [0], [0], [1], [0, 0, 1, 1], [], []>} : vector<2x32xf32>, vector<32x32xf32>, vector<2x32xf32> -> vector<2x32xf32>
      %63 = arith.addf %60, %62 : vector<2x32xf32>
      %c96 = arith.constant 96 : index
      %c0_50 = arith.constant 0 : index
      %64 = vector.load %arg8[%c96, %c0_50] : memref<128x32xf32, #tpu.memory_space<vmem>>, vector<32x32xf32>
      %cst_51 = arith.constant dense<0.000000e+00> : vector<2x32xf32>
      %65 = tpu.matmul %55, %64, %cst_51 {dimension_numbers = #tpu.dot_dimension_numbers<[1], [0], [0], [1], [0, 0, 1, 1], [], []>} : vector<2x32xf32>, vector<32x32xf32>, vector<2x32xf32> -> vector<2x32xf32>
      %66 = arith.addf %63, %65 : vector<2x32xf32>
      %c0_52 = arith.constant 0 : index
      %c0_53 = arith.constant 0 : index
      %67 = vector.load %arg9[%c0_52, %c0_53] : memref<1x32xf32, #tpu.memory_space<vmem>>, vector<1x32xf32>
      %68 = vector.broadcast %67 : vector<1x32xf32> to vector<2x32xf32>
      %69 = arith.addf %66, %68 : vector<2x32xf32>
      %c0_54 = arith.constant 0 : index
      %c0_55 = arith.constant 0 : index
      %70 = vector.load %arg10[%c0_54, %c0_55] : memref<64x128xf32, #tpu.memory_space<vmem>>, vector<32x128xf32>
      %cst_56 = arith.constant dense<0.000000e+00> : vector<2x128xf32>
      %71 = tpu.matmul %69, %70, %cst_56 {dimension_numbers = #tpu.dot_dimension_numbers<[1], [0], [0], [1], [0, 0, 1, 1], [], []>} : vector<2x32xf32>, vector<32x128xf32>, vector<2x128xf32> -> vector<2x128xf32>
      %c32_57 = arith.constant 32 : index
      %c0_58 = arith.constant 0 : index
      %72 = vector.load %arg10[%c32_57, %c0_58] : memref<64x128xf32, #tpu.memory_space<vmem>>, vector<32x128xf32>
      %cst_59 = arith.constant dense<0.000000e+00> : vector<2x128xf32>
      %73 = tpu.matmul %52, %72, %cst_59 {dimension_numbers = #tpu.dot_dimension_numbers<[1], [0], [0], [1], [0, 0, 1, 1], [], []>} : vector<2x32xf32>, vector<32x128xf32>, vector<2x128xf32> -> vector<2x128xf32>
      %74 = arith.addf %71, %73 : vector<2x128xf32>
      %c0_60 = arith.constant 0 : index
      %c0_61 = arith.constant 0 : index
      %75 = vector.load %arg11[%c0_60, %c0_61] : memref<1x128xf32, #tpu.memory_space<vmem>>, vector<1x128xf32>
      %76 = vector.broadcast %75 : vector<1x128xf32> to vector<2x128xf32>
      %77 = arith.addf %74, %76 : vector<2x128xf32>
      %c0_62 = arith.constant 0 : index
      %c0_63 = arith.constant 0 : index
      %78 = vector.load %arg12[%c0_62, %c0_63] : memref<2x128xf32, #tpu.memory_space<vmem>>, vector<2x128xf32>
      tpu.vector_store %arg12[%c0_62, %c0_63], %77 {strides = array<i32>} : memref<2x128xf32, #tpu.memory_space<vmem>>, vector<2x128xf32>,
    } else {
    }
    return
  }
  func.func @transform_0(%arg0: i32, %arg1: i32) -> (i32, i32) {
    %c0_i32 = arith.constant 0 : i32
    return %arg0, %arg1 : i32, i32
  }
  func.func @transform_1(%arg0: i32, %arg1: i32) -> (i32, i32) {
    %c0_i32 = arith.constant 0 : i32
    return %arg0, %arg1 : i32, i32
  }
  func.func @transform_2(%arg0: i32, %arg1: i32) -> (i32, i32, i32) {
    %c0_i32 = arith.constant 0 : i32
    %c0_i32_0 = arith.constant 0 : i32
    return %arg0, %arg1, %c0_i32 : i32, i32, i32
  }
  func.func @transform_3(%arg0: i32, %arg1: i32) -> (i32, i32, i32) {
    %c0_i32 = arith.constant 0 : i32
    %c0_i32_0 = arith.constant 0 : i32
    return %arg0, %arg1, %c0_i32 : i32, i32, i32
  }
  func.func @transform_4(%arg0: i32, %arg1: i32) -> (i32, i32, i32) {
    %c0_i32 = arith.constant 0 : i32
    %c0_i32_0 = arith.constant 0 : i32
    return %arg0, %arg1, %c0_i32 : i32, i32, i32
  }
  func.func @transform_5(%arg0: i32, %arg1: i32) -> (i32, i32, i32) {
    %c0_i32 = arith.constant 0 : i32
    %c0_i32_0 = arith.constant 0 : i32
    return %arg0, %arg1, %c0_i32 : i32, i32, i32
  }
  func.func @transform_6(%arg0: i32, %arg1: i32) -> (i32, i32) {
    %c0_i32 = arith.constant 0 : i32
    %c0_i32_0 = arith.constant 0 : i32
    %c0_i32_1 = arith.constant 0 : i32
    return %c0_i32, %c0_i32_0 : i32, i32
  }
  func.func @transform_7(%arg0: i32, %arg1: i32) -> (i32, i32) {
    %c0_i32 = arith.constant 0 : i32
    %c0_i32_0 = arith.constant 0 : i32
    %c0_i32_1 = arith.constant 0 : i32
    return %c0_i32, %c0_i32_0 : i32, i32
  }
  func.func @transform_8(%arg0: i32, %arg1: i32) -> (i32, i32) {
    %c0_i32 = arith.constant 0 : i32
    %c0_i32_0 = arith.constant 0 : i32
    %c0_i32_1 = arith.constant 0 : i32
    return %c0_i32, %c0_i32_0 : i32, i32
  }
  func.func @transform_9(%arg0: i32, %arg1: i32) -> (i32, i32) {
    %c0_i32 = arith.constant 0 : i32
    %c0_i32_0 = arith.constant 0 : i32
    %c0_i32_1 = arith.constant 0 : i32
    return %c0_i32, %c0_i32_0 : i32, i32
  }
  func.func @transform_10(%arg0: i32, %arg1: i32) -> (i32, i32) {
    %c0_i32 = arith.constant 0 : i32
    %c0_i32_0 = arith.constant 0 : i32
    return %arg0, %c0_i32 : i32, i32
  }
}

</mosaic_0001>

<llo_original>
// kernel: tpu_custom_call.1
$region0: #{tpu_custom_call.1}
  #allocation0 [shape = 'u32[]', space=smem, size = 0x4, offset = 0x4, fixed_abs, tag = 'smem constant byte address 0x4 - core index']
  #allocation1 [shape = 'u32[144,128]{1,0:T(1,128)}', space=vmem, size = 0x12000, scoped, tag = 'internal scratch']
  #allocation2 [shape = 'f32[2,1,32]{2,1,0:T(1,128)}', space=vmem, size = 0x400, scoped, tag = 'scratch operand']
  #allocation3 [shape = 'f32[2,2,32]{2,1,0:T(2,128)}', space=vmem, size = 0x800, scoped, tag = 'scratch operand']
  %s0 = inlined_call_operand.vmem [shape: s32[2,8], index: 0, kind: input, shape index: {}]
  %s1 = inlined_call_operand.vmem [shape: s32[2,8], index: 1, kind: input, shape index: {}]
  %s2 = inlined_call_operand.vmem [shape: f32[2,8,32], index: 2, kind: input, shape index: {}]
  %s3 = inlined_call_operand.vmem [shape: f32[2,8,32], index: 3, kind: input, shape index: {}]
  %s4 = inlined_call_operand.vmem [shape: f32[2,8,32], index: 4, kind: input, shape index: {}]
  %s5 = inlined_call_operand.vmem [shape: f32[2,8,32], index: 5, kind: input, shape index: {}]
  %s6 = inlined_call_operand.vmem [shape: f32[128,32], index: 6, kind: input, shape index: {}]
  %s7 = inlined_call_operand.vmem [shape: f32[1,32], index: 7, kind: input, shape index: {}]
  %s8 = inlined_call_operand.vmem [shape: f32[64,128], index: 8, kind: input, shape index: {}]
  %s9 = inlined_call_operand.vmem [shape: f32[1,128], index: 9, kind: input, shape index: {}]
  %s10 = inlined_call_operand.hbm [shape: f32[2,128], index: 10, kind: output, shape index: {}]
  %s11 = sld [smem:[#allocation0]]
  $region58: #{tpu_custom_call.1} parent=0
    _
  %s13 = ssub.s32 1, %s11
  %s14 = scalar_select 0, %s13, %s11
  $region1: #{tpu_custom_call.1} parent=0
    #allocation4 [shape = 'u8[1024]{0}', space=vmem, size = 0x400, scoped, tag = 'output window, operand 0, single buffered']
    #allocation5 [shape = 's32[1]{0}', space=sflag, size = 0x4, scoped, tag = 'scoped memory for tpu_custom_call.1']
    %15 = vsyncpa [#allocation5], 0
    // Predicated region
    $region2: #{tpu_custom_call.1} parent=1 // pred_check
      _
    $region3: #{tpu_custom_call.1} parent=1 // pred_check_branch
      %17 = sbr.rel (0) target = $region5
    $region4: #{tpu_custom_call.1} parent=1 // pred_region
      _
    $region5: #{tpu_custom_call.1} parent=1 // pred_fallthru
      _
    // Predicated region
    $region6: #{tpu_custom_call.1} parent=1 // pred_check
      _
    $region7: #{tpu_custom_call.1} parent=1 // pred_check_branch
      %19 = sbr.rel (0) target = $region9
    $region8: #{tpu_custom_call.1} parent=1 // pred_region
      _
    $region9: #{tpu_custom_call.1} parent=1 // pred_fallthru
      _
    // Predicated region
    $region10: #{tpu_custom_call.1} parent=1 // pred_check
      _
    $region11: #{tpu_custom_call.1} parent=1 // pred_check_branch
      %21 = sbr.rel (0) target = $region13
    $region12: #{tpu_custom_call.1} parent=1 // pred_region
      _
    $region13: #{tpu_custom_call.1} parent=1 // pred_fallthru
      _
    // Predicated region
    $region14: #{tpu_custom_call.1} parent=1 // pred_check
      _
    $region15: #{tpu_custom_call.1} parent=1 // pred_check_branch
      %23 = sbr.rel (0) target = $region17
    $region16: #{tpu_custom_call.1} parent=1 // pred_region
      _
    $region17: #{tpu_custom_call.1} parent=1 // pred_fallthru
      _
    // Predicated region
    $region18: #{tpu_custom_call.1} parent=1 // pred_check
      _
    $region19: #{tpu_custom_call.1} parent=1 // pred_check_branch
      %25 = sbr.rel (0) target = $region21
    $region20: #{tpu_custom_call.1} parent=1 // pred_region
      _
    $region21: #{tpu_custom_call.1} parent=1 // pred_fallthru
      _
    // Predicated region
    $region22: #{tpu_custom_call.1} parent=1 // pred_check
      _
    $region23: #{tpu_custom_call.1} parent=1 // pred_check_branch
      %27 = sbr.rel (0) target = $region25
    $region24: #{tpu_custom_call.1} parent=1 // pred_region
      _
    $region25: #{tpu_custom_call.1} parent=1 // pred_fallthru
      _
    // Predicated region
    $region26: #{tpu_custom_call.1} parent=1 // pred_check
      _
    $region27: #{tpu_custom_call.1} parent=1 // pred_check_branch
      %29 = sbr.rel (0) target = $region29
    $region28: #{tpu_custom_call.1} parent=1 // pred_region
      _
    $region29: #{tpu_custom_call.1} parent=1 // pred_fallthru
      _
    // Predicated region
    $region30: #{tpu_custom_call.1} parent=1 // pred_check
      _
    $region31: #{tpu_custom_call.1} parent=1 // pred_check_branch
      %31 = sbr.rel (0) target = $region33
    $region32: #{tpu_custom_call.1} parent=1 // pred_region
      _
    $region33: #{tpu_custom_call.1} parent=1 // pred_fallthru
      _
    // Predicated region
    $region34: #{tpu_custom_call.1} parent=1 // pred_check
      _
    $region35: #{tpu_custom_call.1} parent=1 // pred_check_branch
      %33 = sbr.rel (0) target = $region37
    $region36: #{tpu_custom_call.1} parent=1 // pred_region
      _
    $region37: #{tpu_custom_call.1} parent=1 // pred_fallthru
      _
    // Predicated region
    $region38: #{tpu_custom_call.1} parent=1 // pred_check
      _
    $region39: #{tpu_custom_call.1} parent=1 // pred_check_branch
      %35 = sbr.rel (0) target = $region41
    $region40: #{tpu_custom_call.1} parent=1 // pred_region
      _
    $region41: #{tpu_custom_call.1} parent=1 // pred_fallthru
      _
    %p36 = scmp.eq.s32.totalorder 0, 0
    // Predicated region
    $region42: #{tpu_custom_call.1} parent=1 // pred_check
      %p37 = pneg %p36
    $region43: #{tpu_custom_call.1} parent=1 // pred_check_branch
      %39 = sbr.rel (%p37) target = $region45
    $region44: #{tpu_custom_call.1} parent=1 // pred_region
      %vm40 = vcmask 253952
      %41 = vst.msk [vmem:[#allocation2] sm:$0x1] %vm40, 0.0
      %42 = vst.msk [vmem:[#allocation2 + $0x1] sm:$0x1] %vm40, 0.0
      %vm43 = vcmask 254976
      %44 = vst.msk [vmem:[#allocation3] sm:$0x3] %vm43, 0.0
      %45 = vst.msk [vmem:[#allocation3 + $0x2] sm:$0x3] %vm43, 0.0
    $region45: #{tpu_custom_call.1} parent=1 // pred_fallthru
      _
    %v46 = vld [vmem:[%s0] sm:$0x3]
    %v47 = vld [vmem:[%s1] sm:$0x3]
    %vm48 = vcmp.eq.s32.totalorder %v46, 1
    %vm49 = vcmp.eq.s32.totalorder %v47, 1
    %vm50 = vcmp.eq.s32.totalorder %v47, 3
    %v51 = vld [vmem:[%s2] sm:$0xff]
    %v52 = vld [vmem:[%s2 + $0x8] sm:$0xff]
    %v53 = vld [vmem:[%s3] sm:$0xff]
    %v54 = vld [vmem:[%s3 + $0x8] sm:$0xff]
    %v55 = vld [vmem:[%s4] sm:$0xff]
    %v56 = vld [vmem:[%s4 + $0x8] sm:$0xff]
    %v57 = vld [vmem:[%s5] sm:$0xff]
    %v58 = vld [vmem:[%s5 + $0x8] sm:$0xff]
    %v59 = vsel %vm48, 1, 0
    %v60 = vcvt.s32.f32 %v59
    %v63 = vunpack.c.l.s4 1966171168
    %v64 = vunpack.c.0.s8 %v63
    %v65 = vlaneseq
    %v66 = vshrl.u32 %v65, 7
    %v67 = vsub.s32 %v64, %v66
    %v68 = vrot.slane %v60, %v67
    %v69 = vcombine.high %v68, %v68
    %v71 = vunpack.c.l.s4 1966171168
    %v72 = vunpack.c.0.s8 %v71
    %v73 = vlaneseq
    %v74 = vshrl.u32 %v73, 7
    %v75 = vsub.s32 %v72, %v74
    %v76 = vrot.slane %v68, %v75
    %v78 = vunpack.c.l.s4 1966171168
    %v79 = vunpack.c.0.s8 %v78
    %v80 = vlaneseq
    %v81 = vshrl.u32 %v80, 7
    %v82 = vsub.s32 %v79, %v81
    %v83 = vrot.slane %v69, %v82
    %v84 = vsel %vm49, 1, 0
    %v85 = vcvt.s32.f32 %v84
    %v88 = vunpack.c.l.s4 1966171168
    %v89 = vunpack.c.0.s8 %v88
    %v90 = vlaneseq
    %v91 = vshrl.u32 %v90, 7
    %v92 = vsub.s32 %v89, %v91
    %v93 = vrot.slane %v85, %v92
    %v94 = vcombine.high %v93, %v93
    %v96 = vunpack.c.l.s4 1966171168
    %v97 = vunpack.c.0.s8 %v96
    %v98 = vlaneseq
    %v99 = vshrl.u32 %v98, 7
    %v100 = vsub.s32 %v97, %v99
    %v101 = vrot.slane %v93, %v100
    %v103 = vunpack.c.l.s4 1966171168
    %v104 = vunpack.c.0.s8 %v103
    %v105 = vlaneseq
    %v106 = vshrl.u32 %v105, 7
    %v107 = vsub.s32 %v104, %v106
    %v108 = vrot.slane %v94, %v107
    %v111 = vsel %vm50, 1, 0
    %v112 = vcvt.s32.f32 %v111
    %v115 = vunpack.c.l.s4 1966171168
    %v116 = vunpack.c.0.s8 %v115
    %v117 = vlaneseq
    %v118 = vshrl.u32 %v117, 7
    %v119 = vsub.s32 %v116, %v118
    %v120 = vrot.slane %v112, %v119
    %v121 = vcombine.high %v120, %v120
    %v123 = vunpack.c.l.s4 1966171168
    %v124 = vunpack.c.0.s8 %v123
    %v125 = vlaneseq
    %v126 = vshrl.u32 %v125, 7
    %v127 = vsub.s32 %v124, %v126
    %v128 = vrot.slane %v120, %v127
    %v130 = vunpack.c.l.s4 1966171168
    %v131 = vunpack.c.0.s8 %v130
    %v132 = vlaneseq
    %v133 = vshrl.u32 %v132, 7
    %v134 = vsub.s32 %v131, %v133
    %v135 = vrot.slane %v121, %v134
    %v136 = vlaneseq
    %v137 = vshrl.u32 %v136, 7
    %v138 = vsub.s32 0, %v137
    %v139 = vrot.slane %v128, %v138
    %v140 = vlaneseq
    %v141 = vshrl.u32 %v140, 7
    %v142 = vsub.s32 0, %v141
    %v143 = vrot.slane %v135, %v142
    %vm146 = vcmask 1040384
    %v147 = vsel %vm146, %v101, %v139
    %v148 = vsel %vm146, %v108, %v143
    %v149 = vld [vmem:[#allocation2] sm:$0x1]
    %v150 = vld [vmem:[#allocation2 + $0x1] sm:$0x1]
    %vm151 = vcmask 64512
    %v152 = vsel %vm151, %v76, 0
    %154 = vmatprep.subr.mxu0 0.0
    %155 = vmatpush1.msra.mxu0 %v53
    %156 = vmatprep.subr.mxu0 0.0
    %157 = vmatpush1.msra.mxu0 0.0
    %158 = vmatprep.subr.mxu0 0.0
    %159 = vmatpush1.msra.mxu0 0.0
    %160 = vmatprep.subr.mxu0 0.0
    %161 = vmatpush1.msra.mxu0 0.0
    %162 = vmatprep.subr.mxu0 0.0
    %163 = vmatpush1.msra.mxu0 0.0
    %164 = vmatprep.subr.mxu0 0.0
    %165 = vmatpush1.msra.mxu0 0.0
    %166 = vmatprep.subr.mxu0 0.0
    %167 = vmatpush1.msra.mxu0 0.0
    %168 = vmatprep.subr.mxu0 0.0
    %169 = vmatpush1.msra.mxu0 0.0
    %170 = vmatprep.subr.mxu0 0.0
    %171 = vmatpush1.msra.mxu0 0.0
    %172 = vmatprep.subr.mxu0 0.0
    %173 = vmatpush1.msra.mxu0 0.0
    %174 = vmatprep.subr.mxu0 0.0
    %175 = vmatpush1.msra.mxu0 0.0
    %176 = vmatprep.subr.mxu0 0.0
    %177 = vmatpush1.msra.mxu0 0.0
    %178 = vmatprep.subr.mxu0 0.0
    %179 = vmatpush1.msra.mxu0 0.0
    %180 = vmatprep.subr.mxu0 0.0
    %181 = vmatpush1.msra.mxu0 0.0
    %182 = vmatprep.subr.mxu0 0.0
    %183 = vmatpush1.msra.mxu0 0.0
    %184 = vmatprep.subr.mxu0 0.0
    %185 = vmatpush1.msra.mxu0 0.0
    %186 = vmatprep.subr.mxu0 0.0
    %187 = vmatpush1.msra.mxu0 0.0
    %188 = vmatprep.subr.mxu0 0.0
    %189 = vmatpush1.msra.mxu0 0.0
    %190 = vmatprep.subr.mxu0 0.0
    %191 = vmatpush1.msra.mxu0 0.0
    %192 = vmatprep.subr.mxu0 0.0
    %193 = vmatpush1.msra.mxu0 0.0
    %194 = vmatprep.subr.mxu0 0.0
    %195 = vmatpush1.msra.mxu0 0.0
    %196 = vmatprep.subr.mxu0 0.0
    %197 = vmatpush1.msra.mxu0 0.0
    %198 = vmatprep.subr.mxu0 0.0
    %199 = vmatpush1.msra.mxu0 0.0
    %200 = vmatprep.subr.mxu0 0.0
    %201 = vmatpush1.msra.mxu0 0.0
    %202 = vmatprep.subr.mxu0 0.0
    %203 = vmatpush1.msra.mxu0 0.0
    %204 = vmatprep.subr.mxu0 0.0
    %205 = vmatpush1.msra.mxu0 0.0
    %206 = vmatprep.subr.mxu0 0.0
    %207 = vmatpush1.msra.mxu0 0.0
    %208 = vmatprep.subr.mxu0 0.0
    %209 = vmatpush1.msra.mxu0 0.0
    %210 = vmatprep.subr.mxu0 0.0
    %211 = vmatpush1.msra.mxu0 0.0
    %212 = vmatprep.subr.mxu0 0.0
    %213 = vmatpush1.msra.mxu0 0.0
    %214 = vmatprep.subr.mxu0 0.0
    %215 = vmatpush1.msra.mxu0 0.0
    %216 = vmatprep.subr.mxu0 0.0
    %217 = vmatpush1.msra.mxu0 0.0
    %218 = vmatprep.mubr.f32.mxu0 0.0
    %219 = vmatmul.mubr.f32.gmra.mrb[0].mxu0 %v152
    %v220 = vpop.f32.mrb[0].mxu0
    %v221 = vadd.f32 0.0, %v220
    %v222 = vpop.f32.mrb[0].mxu0
    %223 = vdwg.mxu0
    %v224 = vsel %vm151, %v83, 0
    %226 = vmatprep.subr.mxu0 0.0
    %227 = vmatpush1.msra.mxu0 %v54
    %228 = vmatprep.subr.mxu0 0.0
    %229 = vmatpush1.msra.mxu0 0.0
    %230 = vmatprep.subr.mxu0 0.0
    %231 = vmatpush1.msra.mxu0 0.0
    %232 = vmatprep.subr.mxu0 0.0
    %233 = vmatpush1.msra.mxu0 0.0
    %234 = vmatprep.subr.mxu0 0.0
    %235 = vmatpush1.msra.mxu0 0.0
    %236 = vmatprep.subr.mxu0 0.0
    %237 = vmatpush1.msra.mxu0 0.0
    %238 = vmatprep.subr.mxu0 0.0
    %239 = vmatpush1.msra.mxu0 0.0
    %240 = vmatprep.subr.mxu0 0.0
    %241 = vmatpush1.msra.mxu0 0.0
    %242 = vmatprep.subr.mxu0 0.0
    %243 = vmatpush1.msra.mxu0 0.0
    %244 = vmatprep.subr.mxu0 0.0
    %245 = vmatpush1.msra.mxu0 0.0
    %246 = vmatprep.subr.mxu0 0.0
    %247 = vmatpush1.msra.mxu0 0.0
    %248 = vmatprep.subr.mxu0 0.0
    %249 = vmatpush1.msra.mxu0 0.0
    %250 = vmatprep.subr.mxu0 0.0
    %251 = vmatpush1.msra.mxu0 0.0
    %252 = vmatprep.subr.mxu0 0.0
    %253 = vmatpush1.msra.mxu0 0.0
    %254 = vmatprep.subr.mxu0 0.0
    %255 = vmatpush1.msra.mxu0 0.0
    %256 = vmatprep.subr.mxu0 0.0
    %257 = vmatpush1.msra.mxu0 0.0
    %258 = vmatprep.subr.mxu0 0.0
    %259 = vmatpush1.msra.mxu0 0.0
    %260 = vmatprep.subr.mxu0 0.0
    %261 = vmatpush1.msra.mxu0 0.0
    %262 = vmatprep.subr.mxu0 0.0
    %263 = vmatpush1.msra.mxu0 0.0
    %264 = vmatprep.subr.mxu0 0.0
    %265 = vmatpush1.msra.mxu0 0.0
    %266 = vmatprep.subr.mxu0 0.0
    %267 = vmatpush1.msra.mxu0 0.0
    %268 = vmatprep.subr.mxu0 0.0
    %269 = vmatpush1.msra.mxu0 0.0
    %270 = vmatprep.subr.mxu0 0.0
    %271 = vmatpush1.msra.mxu0 0.0
    %272 = vmatprep.subr.mxu0 0.0
    %273 = vmatpush1.msra.mxu0 0.0
    %274 = vmatprep.subr.mxu0 0.0
    %275 = vmatpush1.msra.mxu0 0.0
    %276 = vmatprep.subr.mxu0 0.0
    %277 = vmatpush1.msra.mxu0 0.0
    %278 = vmatprep.subr.mxu0 0.0
    %279 = vmatpush1.msra.mxu0 0.0
    %280 = vmatprep.subr.mxu0 0.0
    %281 = vmatpush1.msra.mxu0 0.0
    %282 = vmatprep.subr.mxu0 0.0
    %283 = vmatpush1.msra.mxu0 0.0
    %284 = vmatprep.subr.mxu0 0.0
    %285 = vmatpush1.msra.mxu0 0.0
    %286 = vmatprep.subr.mxu0 0.0
    %287 = vmatpush1.msra.mxu0 0.0
    %288 = vmatprep.subr.mxu0 0.0
    %289 = vmatpush1.msra.mxu0 0.0
    %290 = vmatprep.mubr.f32.mxu0 0.0
    %291 = vmatmul.mubr.f32.gmra.mrb[0].mxu0 %v224
    %v292 = vpop.f32.mrb[0].mxu0
    %v293 = vadd.f32 0.0, %v292
    %v294 = vpop.f32.mrb[0].mxu0
    %295 = vdwg.mxu0
    %296 = vmatprep.subr.mxu0 0.0
    %297 = vmatpush1.msra.mxu0 %v51
    %298 = vmatprep.subr.mxu0 0.0
    %299 = vmatpush1.msra.mxu0 0.0
    %300 = vmatprep.subr.mxu0 0.0
    %301 = vmatpush1.msra.mxu0 0.0
    %302 = vmatprep.subr.mxu0 0.0
    %303 = vmatpush1.msra.mxu0 0.0
    %304 = vmatprep.subr.mxu0 0.0
    %305 = vmatpush1.msra.mxu0 0.0
    %306 = vmatprep.subr.mxu0 0.0
    %307 = vmatpush1.msra.mxu0 0.0
    %308 = vmatprep.subr.mxu0 0.0
    %309 = vmatpush1.msra.mxu0 0.0
    %310 = vmatprep.subr.mxu0 0.0
    %311 = vmatpush1.msra.mxu0 0.0
    %312 = vmatprep.subr.mxu0 0.0
    %313 = vmatpush1.msra.mxu0 0.0
    %314 = vmatprep.subr.mxu0 0.0
    %315 = vmatpush1.msra.mxu0 0.0
    %316 = vmatprep.subr.mxu0 0.0
    %317 = vmatpush1.msra.mxu0 0.0
    %318 = vmatprep.subr.mxu0 0.0
    %319 = vmatpush1.msra.mxu0 0.0
    %320 = vmatprep.subr.mxu0 0.0
    %321 = vmatpush1.msra.mxu0 0.0
    %322 = vmatprep.subr.mxu0 0.0
    %323 = vmatpush1.msra.mxu0 0.0
    %324 = vmatprep.subr.mxu0 0.0
    %325 = vmatpush1.msra.mxu0 0.0
    %326 = vmatprep.subr.mxu0 0.0
    %327 = vmatpush1.msra.mxu0 0.0
    %328 = vmatprep.subr.mxu0 0.0
    %329 = vmatpush1.msra.mxu0 0.0
    %330 = vmatprep.subr.mxu0 0.0
    %331 = vmatpush1.msra.mxu0 0.0
    %332 = vmatprep.subr.mxu0 0.0
    %333 = vmatpush1.msra.mxu0 0.0
    %334 = vmatprep.subr.mxu0 0.0
    %335 = vmatpush1.msra.mxu0 0.0
    %336 = vmatprep.subr.mxu0 0.0
    %337 = vmatpush1.msra.mxu0 0.0
    %338 = vmatprep.subr.mxu0 0.0
    %339 = vmatpush1.msra.mxu0 0.0
    %340 = vmatprep.subr.mxu0 0.0
    %341 = vmatpush1.msra.mxu0 0.0
    %342 = vmatprep.subr.mxu0 0.0
    %343 = vmatpush1.msra.mxu0 0.0
    %344 = vmatprep.subr.mxu0 0.0
    %345 = vmatpush1.msra.mxu0 0.0
    %346 = vmatprep.subr.mxu0 0.0
    %347 = vmatpush1.msra.mxu0 0.0
    %348 = vmatprep.subr.mxu0 0.0
    %349 = vmatpush1.msra.mxu0 0.0
    %350 = vmatprep.subr.mxu0 0.0
    %351 = vmatpush1.msra.mxu0 0.0
    %352 = vmatprep.subr.mxu0 0.0
    %353 = vmatpush1.msra.mxu0 0.0
    %354 = vmatprep.subr.mxu0 0.0
    %355 = vmatpush1.msra.mxu0 0.0
    %356 = vmatprep.subr.mxu0 0.0
    %357 = vmatpush1.msra.mxu0 0.0
    %358 = vmatprep.subr.mxu0 0.0
    %359 = vmatpush1.msra.mxu0 0.0
    %360 = vmatprep.mubr.f32.mxu0 0.0
    %361 = vmatmul.mubr.f32.gmra.mrb[0].mxu0 %v152
    %v362 = vpop.f32.mrb[0].mxu0
    %v363 = vadd.f32 %v221, %v362
    %v364 = vpop.f32.mrb[0].mxu0
    %365 = vdwg.mxu0
    %366 = vmatprep.subr.mxu0 0.0
    %367 = vmatpush1.msra.mxu0 %v52
    %368 = vmatprep.subr.mxu0 0.0
    %369 = vmatpush1.msra.mxu0 0.0
    %370 = vmatprep.subr.mxu0 0.0
    %371 = vmatpush1.msra.mxu0 0.0
    %372 = vmatprep.subr.mxu0 0.0
    %373 = vmatpush1.msra.mxu0 0.0
    %374 = vmatprep.subr.mxu0 0.0
    %375 = vmatpush1.msra.mxu0 0.0
    %376 = vmatprep.subr.mxu0 0.0
    %377 = vmatpush1.msra.mxu0 0.0
    %378 = vmatprep.subr.mxu0 0.0
    %379 = vmatpush1.msra.mxu0 0.0
    %380 = vmatprep.subr.mxu0 0.0
    %381 = vmatpush1.msra.mxu0 0.0
    %382 = vmatprep.subr.mxu0 0.0
    %383 = vmatpush1.msra.mxu0 0.0
    %384 = vmatprep.subr.mxu0 0.0
    %385 = vmatpush1.msra.mxu0 0.0
    %386 = vmatprep.subr.mxu0 0.0
    %387 = vmatpush1.msra.mxu0 0.0
    %388 = vmatprep.subr.mxu0 0.0
    %389 = vmatpush1.msra.mxu0 0.0
    %390 = vmatprep.subr.mxu0 0.0
    %391 = vmatpush1.msra.mxu0 0.0
    %392 = vmatprep.subr.mxu0 0.0
    %393 = vmatpush1.msra.mxu0 0.0
    %394 = vmatprep.subr.mxu0 0.0
    %395 = vmatpush1.msra.mxu0 0.0
    %396 = vmatprep.subr.mxu0 0.0
    %397 = vmatpush1.msra.mxu0 0.0
    %398 = vmatprep.subr.mxu0 0.0
    %399 = vmatpush1.msra.mxu0 0.0
    %400 = vmatprep.subr.mxu0 0.0
    %401 = vmatpush1.msra.mxu0 0.0
    %402 = vmatprep.subr.mxu0 0.0
    %403 = vmatpush1.msra.mxu0 0.0
    %404 = vmatprep.subr.mxu0 0.0
    %405 = vmatpush1.msra.mxu0 0.0
    %406 = vmatprep.subr.mxu0 0.0
    %407 = vmatpush1.msra.mxu0 0.0
    %408 = vmatprep.subr.mxu0 0.0
    %409 = vmatpush1.msra.mxu0 0.0
    %410 = vmatprep.subr.mxu0 0.0
    %411 = vmatpush1.msra.mxu0 0.0
    %412 = vmatprep.subr.mxu0 0.0
    %413 = vmatpush1.msra.mxu0 0.0
    %414 = vmatprep.subr.mxu0 0.0
    %415 = vmatpush1.msra.mxu0 0.0
    %416 = vmatprep.subr.mxu0 0.0
    %417 = vmatpush1.msra.mxu0 0.0
    %418 = vmatprep.subr.mxu0 0.0
    %419 = vmatpush1.msra.mxu0 0.0
    %420 = vmatprep.subr.mxu0 0.0
    %421 = vmatpush1.msra.mxu0 0.0
    %422 = vmatprep.subr.mxu0 0.0
    %423 = vmatpush1.msra.mxu0 0.0
    %424 = vmatprep.subr.mxu0 0.0
    %425 = vmatpush1.msra.mxu0 0.0
    %426 = vmatprep.subr.mxu0 0.0
    %427 = vmatpush1.msra.mxu0 0.0
    %428 = vmatprep.subr.mxu0 0.0
    %429 = vmatpush1.msra.mxu0 0.0
    %430 = vmatprep.mubr.f32.mxu0 0.0
    %431 = vmatmul.mubr.f32.gmra.mrb[0].mxu0 %v224
    %v432 = vpop.f32.mrb[0].mxu0
    %v433 = vadd.f32 %v293, %v432
    %v434 = vpop.f32.mrb[0].mxu0
    %435 = vdwg.mxu0
    %v436 = vadd.f32 %v149, %v363
    %v437 = vadd.f32 %v150, %v433
    %vm438 = vcmask 253952
    %439 = vst.msk [vmem:[#allocation2] sm:$0x1] %vm438, %v436
    %440 = vst.msk [vmem:[#allocation2 + $0x1] sm:$0x1] %vm438, %v437
    %v441 = vld [vmem:[#allocation3] sm:$0x3]
    %v442 = vld [vmem:[#allocation3 + $0x2] sm:$0x3]
    %v444 = vsel %vm151, %v147, 0
    %446 = vmatprep.subr.mxu0 0.0
    %447 = vmatpush1.msra.mxu0 %v57
    %448 = vmatprep.subr.mxu0 0.0
    %449 = vmatpush1.msra.mxu0 0.0
    %450 = vmatprep.subr.mxu0 0.0
    %451 = vmatpush1.msra.mxu0 0.0
    %452 = vmatprep.subr.mxu0 0.0
    %453 = vmatpush1.msra.mxu0 0.0
    %454 = vmatprep.subr.mxu0 0.0
    %455 = vmatpush1.msra.mxu0 0.0
    %456 = vmatprep.subr.mxu0 0.0
    %457 = vmatpush1.msra.mxu0 0.0
    %458 = vmatprep.subr.mxu0 0.0
    %459 = vmatpush1.msra.mxu0 0.0
    %460 = vmatprep.subr.mxu0 0.0
    %461 = vmatpush1.msra.mxu0 0.0
    %462 = vmatprep.subr.mxu0 0.0
    %463 = vmatpush1.msra.mxu0 0.0
    %464 = vmatprep.subr.mxu0 0.0
    %465 = vmatpush1.msra.mxu0 0.0
    %466 = vmatprep.subr.mxu0 0.0
    %467 = vmatpush1.msra.mxu0 0.0
    %468 = vmatprep.subr.mxu0 0.0
    %469 = vmatpush1.msra.mxu0 0.0
    %470 = vmatprep.subr.mxu0 0.0
    %471 = vmatpush1.msra.mxu0 0.0
    %472 = vmatprep.subr.mxu0 0.0
    %473 = vmatpush1.msra.mxu0 0.0
    %474 = vmatprep.subr.mxu0 0.0
    %475 = vmatpush1.msra.mxu0 0.0
    %476 = vmatprep.subr.mxu0 0.0
    %477 = vmatpush1.msra.mxu0 0.0
    %478 = vmatprep.subr.mxu0 0.0
    %479 = vmatpush1.msra.mxu0 0.0
    %480 = vmatprep.subr.mxu0 0.0
    %481 = vmatpush1.msra.mxu0 0.0
    %482 = vmatprep.subr.mxu0 0.0
    %483 = vmatpush1.msra.mxu0 0.0
    %484 = vmatprep.subr.mxu0 0.0
    %485 = vmatpush1.msra.mxu0 0.0
    %486 = vmatprep.subr.mxu0 0.0
    %487 = vmatpush1.msra.mxu0 0.0
    %488 = vmatprep.subr.mxu0 0.0
    %489 = vmatpush1.msra.mxu0 0.0
    %490 = vmatprep.subr.mxu0 0.0
    %491 = vmatpush1.msra.mxu0 0.0
    %492 = vmatprep.subr.mxu0 0.0
    %493 = vmatpush1.msra.mxu0 0.0
    %494 = vmatprep.subr.mxu0 0.0
    %495 = vmatpush1.msra.mxu0 0.0
    %496 = vmatprep.subr.mxu0 0.0
    %497 = vmatpush1.msra.mxu0 0.0
    %498 = vmatprep.subr.mxu0 0.0
    %499 = vmatpush1.msra.mxu0 0.0
    %500 = vmatprep.subr.mxu0 0.0
    %501 = vmatpush1.msra.mxu0 0.0
    %502 = vmatprep.subr.mxu0 0.0
    %503 = vmatpush1.msra.mxu0 0.0
    %504 = vmatprep.subr.mxu0 0.0
    %505 = vmatpush1.msra.mxu0 0.0
    %506 = vmatprep.subr.mxu0 0.0
    %507 = vmatpush1.msra.mxu0 0.0
    %508 = vmatprep.subr.mxu0 0.0
    %509 = vmatpush1.msra.mxu0 0.0
    %510 = vmatprep.mubr.f32.mxu0 0.0
    %511 = vmatmul.mubr.f32.gmra.mrb[0].mxu0 %v444
    %v512 = vpop.f32.mrb[0].mxu0
    %v513 = vadd.f32 0.0, %v512
    %v514 = vpop.f32.mrb[0].mxu0
    %515 = vdwg.mxu0
    %v517 = vsel %vm151, %v148, 0
    %519 = vmatprep.subr.mxu0 0.0
    %520 = vmatpush1.msra.mxu0 %v58
    %521 = vmatprep.subr.mxu0 0.0
    %522 = vmatpush1.msra.mxu0 0.0
    %523 = vmatprep.subr.mxu0 0.0
    %524 = vmatpush1.msra.mxu0 0.0
    %525 = vmatprep.subr.mxu0 0.0
    %526 = vmatpush1.msra.mxu0 0.0
    %527 = vmatprep.subr.mxu0 0.0
    %528 = vmatpush1.msra.mxu0 0.0
    %529 = vmatprep.subr.mxu0 0.0
    %530 = vmatpush1.msra.mxu0 0.0
    %531 = vmatprep.subr.mxu0 0.0
    %532 = vmatpush1.msra.mxu0 0.0
    %533 = vmatprep.subr.mxu0 0.0
    %534 = vmatpush1.msra.mxu0 0.0
    %535 = vmatprep.subr.mxu0 0.0
    %536 = vmatpush1.msra.mxu0 0.0
    %537 = vmatprep.subr.mxu0 0.0
    %538 = vmatpush1.msra.mxu0 0.0
    %539 = vmatprep.subr.mxu0 0.0
    %540 = vmatpush1.msra.mxu0 0.0
    %541 = vmatprep.subr.mxu0 0.0
    %542 = vmatpush1.msra.mxu0 0.0
    %543 = vmatprep.subr.mxu0 0.0
    %544 = vmatpush1.msra.mxu0 0.0
    %545 = vmatprep.subr.mxu0 0.0
    %546 = vmatpush1.msra.mxu0 0.0
    %547 = vmatprep.subr.mxu0 0.0
    %548 = vmatpush1.msra.mxu0 0.0
    %549 = vmatprep.subr.mxu0 0.0
    %550 = vmatpush1.msra.mxu0 0.0
    %551 = vmatprep.subr.mxu0 0.0
    %552 = vmatpush1.msra.mxu0 0.0
    %553 = vmatprep.subr.mxu0 0.0
    %554 = vmatpush1.msra.mxu0 0.0
    %555 = vmatprep.subr.mxu0 0.0
    %556 = vmatpush1.msra.mxu0 0.0
    %557 = vmatprep.subr.mxu0 0.0
    %558 = vmatpush1.msra.mxu0 0.0
    %559 = vmatprep.subr.mxu0 0.0
    %560 = vmatpush1.msra.mxu0 0.0
    %561 = vmatprep.subr.mxu0 0.0
    %562 = vmatpush1.msra.mxu0 0.0
    %563 = vmatprep.subr.mxu0 0.0
    %564 = vmatpush1.msra.mxu0 0.0
    %565 = vmatprep.subr.mxu0 0.0
    %566 = vmatpush1.msra.mxu0 0.0
    %567 = vmatprep.subr.mxu0 0.0
    %568 = vmatpush1.msra.mxu0 0.0
    %569 = vmatprep.subr.mxu0 0.0
    %570 = vmatpush1.msra.mxu0 0.0
    %571 = vmatprep.subr.mxu0 0.0
    %572 = vmatpush1.msra.mxu0 0.0
    %573 = vmatprep.subr.mxu0 0.0
    %574 = vmatpush1.msra.mxu0 0.0
    %575 = vmatprep.subr.mxu0 0.0
    %576 = vmatpush1.msra.mxu0 0.0
    %577 = vmatprep.subr.mxu0 0.0
    %578 = vmatpush1.msra.mxu0 0.0
    %579 = vmatprep.subr.mxu0 0.0
    %580 = vmatpush1.msra.mxu0 0.0
    %581 = vmatprep.subr.mxu0 0.0
    %582 = vmatpush1.msra.mxu0 0.0
    %583 = vmatprep.mubr.f32.mxu0 0.0
    %584 = vmatmul.mubr.f32.gmra.mrb[0].mxu0 %v517
    %v585 = vpop.f32.mrb[0].mxu0
    %v586 = vadd.f32 0.0, %v585
    %v587 = vpop.f32.mrb[0].mxu0
    %588 = vdwg.mxu0
    %589 = vmatprep.subr.mxu0 0.0
    %590 = vmatpush1.msra.mxu0 %v55
    %591 = vmatprep.subr.mxu0 0.0
    %592 = vmatpush1.msra.mxu0 0.0
    %593 = vmatprep.subr.mxu0 0.0
    %594 = vmatpush1.msra.mxu0 0.0
    %595 = vmatprep.subr.mxu0 0.0
    %596 = vmatpush1.msra.mxu0 0.0
    %597 = vmatprep.subr.mxu0 0.0
    %598 = vmatpush1.msra.mxu0 0.0
    %599 = vmatprep.subr.mxu0 0.0
    %600 = vmatpush1.msra.mxu0 0.0
    %601 = vmatprep.subr.mxu0 0.0
    %602 = vmatpush1.msra.mxu0 0.0
    %603 = vmatprep.subr.mxu0 0.0
    %604 = vmatpush1.msra.mxu0 0.0
    %605 = vmatprep.subr.mxu0 0.0
    %606 = vmatpush1.msra.mxu0 0.0
    %607 = vmatprep.subr.mxu0 0.0
    %608 = vmatpush1.msra.mxu0 0.0
    %609 = vmatprep.subr.mxu0 0.0
    %610 = vmatpush1.msra.mxu0 0.0
    %611 = vmatprep.subr.mxu0 0.0
    %612 = vmatpush1.msra.mxu0 0.0
    %613 = vmatprep.subr.mxu0 0.0
    %614 = vmatpush1.msra.mxu0 0.0
    %615 = vmatprep.subr.mxu0 0.0
    %616 = vmatpush1.msra.mxu0 0.0
    %617 = vmatprep.subr.mxu0 0.0
    %618 = vmatpush1.msra.mxu0 0.0
    %619 = vmatprep.subr.mxu0 0.0
    %620 = vmatpush1.msra.mxu0 0.0
    %621 = vmatprep.subr.mxu0 0.0
    %622 = vmatpush1.msra.mxu0 0.0
    %623 = vmatprep.subr.mxu0 0.0
    %624 = vmatpush1.msra.mxu0 0.0
    %625 = vmatprep.subr.mxu0 0.0
    %626 = vmatpush1.msra.mxu0 0.0
    %627 = vmatprep.subr.mxu0 0.0
    %628 = vmatpush1.msra.mxu0 0.0
    %629 = vmatprep.subr.mxu0 0.0
    %630 = vmatpush1.msra.mxu0 0.0
    %631 = vmatprep.subr.mxu0 0.0
    %632 = vmatpush1.msra.mxu0 0.0
    %633 = vmatprep.subr.mxu0 0.0
    %634 = vmatpush1.msra.mxu0 0.0
    %635 = vmatprep.subr.mxu0 0.0
    %636 = vmatpush1.msra.mxu0 0.0
    %637 = vmatprep.subr.mxu0 0.0
    %638 = vmatpush1.msra.mxu0 0.0
    %639 = vmatprep.subr.mxu0 0.0
    %640 = vmatpush1.msra.mxu0 0.0
    %641 = vmatprep.subr.mxu0 0.0
    %642 = vmatpush1.msra.mxu0 0.0
    %643 = vmatprep.subr.mxu0 0.0
    %644 = vmatpush1.msra.mxu0 0.0
    %645 = vmatprep.subr.mxu0 0.0
    %646 = vmatpush1.msra.mxu0 0.0
    %647 = vmatprep.subr.mxu0 0.0
    %648 = vmatpush1.msra.mxu0 0.0
    %649 = vmatprep.subr.mxu0 0.0
    %650 = vmatpush1.msra.mxu0 0.0
    %651 = vmatprep.subr.mxu0 0.0
    %652 = vmatpush1.msra.mxu0 0.0
    %653 = vmatprep.mubr.f32.mxu0 0.0
    %654 = vmatmul.mubr.f32.gmra.mrb[0].mxu0 %v444
    %v655 = vpop.f32.mrb[0].mxu0
    %v656 = vadd.f32 %v513, %v655
    %v657 = vpop.f32.mrb[0].mxu0
    %658 = vdwg.mxu0
    %659 = vmatprep.subr.mxu0 0.0
    %660 = vmatpush1.msra.mxu0 %v56
    %661 = vmatprep.subr.mxu0 0.0
    %662 = vmatpush1.msra.mxu0 0.0
    %663 = vmatprep.subr.mxu0 0.0
    %664 = vmatpush1.msra.mxu0 0.0
    %665 = vmatprep.subr.mxu0 0.0
    %666 = vmatpush1.msra.mxu0 0.0
    %667 = vmatprep.subr.mxu0 0.0
    %668 = vmatpush1.msra.mxu0 0.0
    %669 = vmatprep.subr.mxu0 0.0
    %670 = vmatpush1.msra.mxu0 0.0
    %671 = vmatprep.subr.mxu0 0.0
    %672 = vmatpush1.msra.mxu0 0.0
    %673 = vmatprep.subr.mxu0 0.0
    %674 = vmatpush1.msra.mxu0 0.0
    %675 = vmatprep.subr.mxu0 0.0
    %676 = vmatpush1.msra.mxu0 0.0
    %677 = vmatprep.subr.mxu0 0.0
    %678 = vmatpush1.msra.mxu0 0.0
    %679 = vmatprep.subr.mxu0 0.0
    %680 = vmatpush1.msra.mxu0 0.0
    %681 = vmatprep.subr.mxu0 0.0
    %682 = vmatpush1.msra.mxu0 0.0
    %683 = vmatprep.subr.mxu0 0.0
    %684 = vmatpush1.msra.mxu0 0.0
    %685 = vmatprep.subr.mxu0 0.0
    %686 = vmatpush1.msra.mxu0 0.0
    %687 = vmatprep.subr.mxu0 0.0
    %688 = vmatpush1.msra.mxu0 0.0
    %689 = vmatprep.subr.mxu0 0.0
    %690 = vmatpush1.msra.mxu0 0.0
    %691 = vmatprep.subr.mxu0 0.0
    %692 = vmatpush1.msra.mxu0 0.0
    %693 = vmatprep.subr.mxu0 0.0
    %694 = vmatpush1.msra.mxu0 0.0
    %695 = vmatprep.subr.mxu0 0.0
    %696 = vmatpush1.msra.mxu0 0.0
    %697 = vmatprep.subr.mxu0 0.0
    %698 = vmatpush1.msra.mxu0 0.0
    %699 = vmatprep.subr.mxu0 0.0
    %700 = vmatpush1.msra.mxu0 0.0
    %701 = vmatprep.subr.mxu0 0.0
    %702 = vmatpush1.msra.mxu0 0.0
    %703 = vmatprep.subr.mxu0 0.0
    %704 = vmatpush1.msra.mxu0 0.0
    %705 = vmatprep.subr.mxu0 0.0
    %706 = vmatpush1.msra.mxu0 0.0
    %707 = vmatprep.subr.mxu0 0.0
    %708 = vmatpush1.msra.mxu0 0.0
    %709 = vmatprep.subr.mxu0 0.0
    %710 = vmatpush1.msra.mxu0 0.0
    %711 = vmatprep.subr.mxu0 0.0
    %712 = vmatpush1.msra.mxu0 0.0
    %713 = vmatprep.subr.mxu0 0.0
    %714 = vmatpush1.msra.mxu0 0.0
    %715 = vmatprep.subr.mxu0 0.0
    %716 = vmatpush1.msra.mxu0 0.0
    %717 = vmatprep.subr.mxu0 0.0
    %718 = vmatpush1.msra.mxu0 0.0
    %719 = vmatprep.subr.mxu0 0.0
    %720 = vmatpush1.msra.mxu0 0.0
    %721 = vmatprep.subr.mxu0 0.0
    %722 = vmatpush1.msra.mxu0 0.0
    %723 = vmatprep.mubr.f32.mxu0 0.0
    %724 = vmatmul.mubr.f32.gmra.mrb[0].mxu0 %v517
    %v725 = vpop.f32.mrb[0].mxu0
    %v726 = vadd.f32 %v586, %v725
    %v727 = vpop.f32.mrb[0].mxu0
    %728 = vdwg.mxu0
    %v729 = vadd.f32 %v441, %v656
    %v730 = vadd.f32 %v442, %v726
    %vm731 = vcmask 254976
    %732 = vst.msk [vmem:[#allocation3] sm:$0x3] %vm731, %v729
    %733 = vst.msk [vmem:[#allocation3 + $0x2] sm:$0x3] %vm731, %v730
    // Predicated region
    $region46: #{tpu_custom_call.1} parent=1 // pred_check
      %p734 = pneg %p36
    $region47: #{tpu_custom_call.1} parent=1 // pred_check_branch
      %736 = sbr.rel (%p734) target = $region49
    $region48: #{tpu_custom_call.1} parent=1 // pred_region
      %v737 = vld [vmem:[#allocation2] sm:$0x1]
      %v738 = vld [vmem:[#allocation2 + $0x1] sm:$0x1]
      %v739 = vld [vmem:[#allocation3] sm:$0x3]
      %v740 = vld [vmem:[#allocation3 + $0x2] sm:$0x3]
      %v741 = vmul.f32 %v737, 0.0625
      %v742 = vmul.f32 %v738, 0.0625
      %v743 = vmul.f32 %v739, 0.0625
      %v744 = vmul.f32 %v740, 0.0625
      %v745 = vsub.f32 %v741, %v743
      %v746 = vsub.f32 %v742, %v744
      %v747 = vand.u32 2147483647, %v745
      %v748 = vand.u32 2147483647, %v746
      %v749 = vmul.f32 %v741, %v743
      %v750 = vmul.f32 %v742, %v744
      %v751 = vld [vmem:[%s6] sm:$0xff]
      %v752 = vld [vmem:[%s6 + $0x8] sm:$0xff]
      %v753 = vld [vmem:[%s6 + $0x10] sm:$0xff]
      %v754 = vld [vmem:[%s6 + $0x18] sm:$0xff]
      %v755 = vld [vmem:[%s6 + $0x20] sm:$0xff]
      %v756 = vld [vmem:[%s6 + $0x28] sm:$0xff]
      %v757 = vld [vmem:[%s6 + $0x30] sm:$0xff]
      %v758 = vld [vmem:[%s6 + $0x38] sm:$0xff]
      %v761 = vrot.slane %v744, 7
      %vm762 = vcmask 1041409
      %v763 = vsel %vm762, %v761, %v743
      %vm764 = vcmask 261120
      %v765 = vsel %vm764, %v763, 0
      %767 = vmatprep.subr.mxu0 0.0
      %768 = vmatpush1.msra.mxu0 %v755
      %769 = vmatprep.subr.mxu0 0.0
      %770 = vmatpush1.msra.mxu0 %v756
      %771 = vmatprep.subr.mxu0 0.0
      %772 = vmatpush1.msra.mxu0 %v757
      %773 = vmatprep.subr.mxu0 0.0
      %774 = vmatpush1.msra.mxu0 %v758
      %775 = vmatprep.subr.mxu0 0.0
      %776 = vmatpush1.msra.mxu0 0.0
      %777 = vmatprep.subr.mxu0 0.0
      %778 = vmatpush1.msra.mxu0 0.0
      %779 = vmatprep.subr.mxu0 0.0
      %780 = vmatpush1.msra.mxu0 0.0
      %781 = vmatprep.subr.mxu0 0.0
      %782 = vmatpush1.msra.mxu0 0.0
      %783 = vmatprep.subr.mxu0 0.0
      %784 = vmatpush1.msra.mxu0 0.0
      %785 = vmatprep.subr.mxu0 0.0
      %786 = vmatpush1.msra.mxu0 0.0
      %787 = vmatprep.subr.mxu0 0.0
      %788 = vmatpush1.msra.mxu0 0.0
      %789 = vmatprep.subr.mxu0 0.0
      %790 = vmatpush1.msra.mxu0 0.0
      %791 = vmatprep.subr.mxu0 0.0
      %792 = vmatpush1.msra.mxu0 0.0
      %793 = vmatprep.subr.mxu0 0.0
      %794 = vmatpush1.msra.mxu0 0.0
      %795 = vmatprep.subr.mxu0 0.0
      %796 = vmatpush1.msra.mxu0 0.0
      %797 = vmatprep.subr.mxu0 0.0
      %798 = vmatpush1.msra.mxu0 0.0
      %799 = vmatprep.subr.mxu0 0.0
      %800 = vmatpush1.msra.mxu0 0.0
      %801 = vmatprep.subr.mxu0 0.0
      %802 = vmatpush1.msra.mxu0 0.0
      %803 = vmatprep.subr.mxu0 0.0
      %804 = vmatpush1.msra.mxu0 0.0
      %805 = vmatprep.subr.mxu0 0.0
      %806 = vmatpush1.msra.mxu0 0.0
      %807 = vmatprep.subr.mxu0 0.0
      %808 = vmatpush1.msra.mxu0 0.0
      %809 = vmatprep.subr.mxu0 0.0
      %810 = vmatpush1.msra.mxu0 0.0
      %811 = vmatprep.subr.mxu0 0.0
      %812 = vmatpush1.msra.mxu0 0.0
      %813 = vmatprep.subr.mxu0 0.0
      %814 = vmatpush1.msra.mxu0 0.0
      %815 = vmatprep.subr.mxu0 0.0
      %816 = vmatpush1.msra.mxu0 0.0
      %817 = vmatprep.subr.mxu0 0.0
      %818 = vmatpush1.msra.mxu0 0.0
      %819 = vmatprep.subr.mxu0 0.0
      %820 = vmatpush1.msra.mxu0 0.0
      %821 = vmatprep.subr.mxu0 0.0
      %822 = vmatpush1.msra.mxu0 0.0
      %823 = vmatprep.subr.mxu0 0.0
      %824 = vmatpush1.msra.mxu0 0.0
      %825 = vmatprep.subr.mxu0 0.0
      %826 = vmatpush1.msra.mxu0 0.0
      %827 = vmatprep.subr.mxu0 0.0
      %828 = vmatpush1.msra.mxu0 0.0
      %829 = vmatprep.subr.mxu0 0.0
      %830 = vmatpush1.msra.mxu0 0.0
      %831 = vmatprep.mubr.f32.mxu0 0.0
      %832 = vmatmul.mubr.f32.gmra.mrb[0].mxu0 %v765
      %v833 = vpop.f32.mrb[0].mxu0
      %v834 = vadd.f32 0.0, %v833
      %v835 = vpop.f32.mrb[0].mxu0
      %836 = vdwg.mxu0
      %v839 = vcombine.low %v741, %v742
      %v841 = vunpack.c.l.s4 1966171168
      %v842 = vunpack.c.0.s8 %v841
      %v843 = vlaneseq
      %v844 = vshrl.u32 %v843, 7
      %v845 = vsub.s32 %v842, %v844
      %v846 = vrot.slane %v839, %v845
      %v848 = vunpack.c.l.s4 1966171168
      %v849 = vunpack.c.0.s8 %v848
      %v850 = vlaneseq
      %v851 = vshrl.u32 %v850, 7
      %v852 = vsub.s32 %v849, %v851
      %v853 = vrot.slane %v846, %v852
      %v854 = vsel %vm764, %v853, 0
      %856 = vmatprep.subr.mxu0 0.0
      %857 = vmatpush1.msra.mxu0 %v751
      %858 = vmatprep.subr.mxu0 0.0
      %859 = vmatpush1.msra.mxu0 %v752
      %860 = vmatprep.subr.mxu0 0.0
      %861 = vmatpush1.msra.mxu0 %v753
      %862 = vmatprep.subr.mxu0 0.0
      %863 = vmatpush1.msra.mxu0 %v754
      %864 = vmatprep.subr.mxu0 0.0
      %865 = vmatpush1.msra.mxu0 0.0
      %866 = vmatprep.subr.mxu0 0.0
      %867 = vmatpush1.msra.mxu0 0.0
      %868 = vmatprep.subr.mxu0 0.0
      %869 = vmatpush1.msra.mxu0 0.0
      %870 = vmatprep.subr.mxu0 0.0
      %871 = vmatpush1.msra.mxu0 0.0
      %872 = vmatprep.subr.mxu0 0.0
      %873 = vmatpush1.msra.mxu0 0.0
      %874 = vmatprep.subr.mxu0 0.0
      %875 = vmatpush1.msra.mxu0 0.0
      %876 = vmatprep.subr.mxu0 0.0
      %877 = vmatpush1.msra.mxu0 0.0
      %878 = vmatprep.subr.mxu0 0.0
      %879 = vmatpush1.msra.mxu0 0.0
      %880 = vmatprep.subr.mxu0 0.0
      %881 = vmatpush1.msra.mxu0 0.0
      %882 = vmatprep.subr.mxu0 0.0
      %883 = vmatpush1.msra.mxu0 0.0
      %884 = vmatprep.subr.mxu0 0.0
      %885 = vmatpush1.msra.mxu0 0.0
      %886 = vmatprep.subr.mxu0 0.0
      %887 = vmatpush1.msra.mxu0 0.0
      %888 = vmatprep.subr.mxu0 0.0
      %889 = vmatpush1.msra.mxu0 0.0
      %890 = vmatprep.subr.mxu0 0.0
      %891 = vmatpush1.msra.mxu0 0.0
      %892 = vmatprep.subr.mxu0 0.0
      %893 = vmatpush1.msra.mxu0 0.0
      %894 = vmatprep.subr.mxu0 0.0
      %895 = vmatpush1.msra.mxu0 0.0
      %896 = vmatprep.subr.mxu0 0.0
      %897 = vmatpush1.msra.mxu0 0.0
      %898 = vmatprep.subr.mxu0 0.0
      %899 = vmatpush1.msra.mxu0 0.0
      %900 = vmatprep.subr.mxu0 0.0
      %901 = vmatpush1.msra.mxu0 0.0
      %902 = vmatprep.subr.mxu0 0.0
      %903 = vmatpush1.msra.mxu0 0.0
      %904 = vmatprep.subr.mxu0 0.0
      %905 = vmatpush1.msra.mxu0 0.0
      %906 = vmatprep.subr.mxu0 0.0
      %907 = vmatpush1.msra.mxu0 0.0
      %908 = vmatprep.subr.mxu0 0.0
      %909 = vmatpush1.msra.mxu0 0.0
      %910 = vmatprep.subr.mxu0 0.0
      %911 = vmatpush1.msra.mxu0 0.0
      %912 = vmatprep.subr.mxu0 0.0
      %913 = vmatpush1.msra.mxu0 0.0
      %914 = vmatprep.subr.mxu0 0.0
      %915 = vmatpush1.msra.mxu0 0.0
      %916 = vmatprep.subr.mxu0 0.0
      %917 = vmatpush1.msra.mxu0 0.0
      %918 = vmatprep.subr.mxu0 0.0
      %919 = vmatpush1.msra.mxu0 0.0
      %920 = vmatprep.mubr.f32.mxu0 0.0
      %921 = vmatmul.mubr.f32.gmra.mrb[0].mxu0 %v854
      %v922 = vpop.f32.mrb[0].mxu0
      %v923 = vadd.f32 %v834, %v922
      %v924 = vpop.f32.mrb[0].mxu0
      %925 = vdwg.mxu0
      %v926 = vld [vmem:[%s6 + $0x40] sm:$0xff]
      %v927 = vld [vmem:[%s6 + $0x48] sm:$0xff]
      %v928 = vld [vmem:[%s6 + $0x50] sm:$0xff]
      %v929 = vld [vmem:[%s6 + $0x58] sm:$0xff]
      %v932 = vcombine.low %v747, %v748
      %v934 = vunpack.c.l.s4 1966171168
      %v935 = vunpack.c.0.s8 %v934
      %v936 = vlaneseq
      %v937 = vshrl.u32 %v936, 7
      %v938 = vsub.s32 %v935, %v937
      %v939 = vrot.slane %v932, %v938
      %v941 = vunpack.c.l.s4 1966171168
      %v942 = vunpack.c.0.s8 %v941
      %v943 = vlaneseq
      %v944 = vshrl.u32 %v943, 7
      %v945 = vsub.s32 %v942, %v944
      %v946 = vrot.slane %v939, %v945
      %v947 = vsel %vm764, %v946, 0
      %949 = vmatprep.subr.mxu0 0.0
      %950 = vmatpush1.msra.mxu0 %v926
      %951 = vmatprep.subr.mxu0 0.0
      %952 = vmatpush1.msra.mxu0 %v927
      %953 = vmatprep.subr.mxu0 0.0
      %954 = vmatpush1.msra.mxu0 %v928
      %955 = vmatprep.subr.mxu0 0.0
      %956 = vmatpush1.msra.mxu0 %v929
      %957 = vmatprep.subr.mxu0 0.0
      %958 = vmatpush1.msra.mxu0 0.0
      %959 = vmatprep.subr.mxu0 0.0
      %960 = vmatpush1.msra.mxu0 0.0
      %961 = vmatprep.subr.mxu0 0.0
      %962 = vmatpush1.msra.mxu0 0.0
      %963 = vmatprep.subr.mxu0 0.0
      %964 = vmatpush1.msra.mxu0 0.0
      %965 = vmatprep.subr.mxu0 0.0
      %966 = vmatpush1.msra.mxu0 0.0
      %967 = vmatprep.subr.mxu0 0.0
      %968 = vmatpush1.msra.mxu0 0.0
      %969 = vmatprep.subr.mxu0 0.0
      %970 = vmatpush1.msra.mxu0 0.0
      %971 = vmatprep.subr.mxu0 0.0
      %972 = vmatpush1.msra.mxu0 0.0
      %973 = vmatprep.subr.mxu0 0.0
      %974 = vmatpush1.msra.mxu0 0.0
      %975 = vmatprep.subr.mxu0 0.0
      %976 = vmatpush1.msra.mxu0 0.0
      %977 = vmatprep.subr.mxu0 0.0
      %978 = vmatpush1.msra.mxu0 0.0
      %979 = vmatprep.subr.mxu0 0.0
      %980 = vmatpush1.msra.mxu0 0.0
      %981 = vmatprep.subr.mxu0 0.0
      %982 = vmatpush1.msra.mxu0 0.0
      %983 = vmatprep.subr.mxu0 0.0
      %984 = vmatpush1.msra.mxu0 0.0
      %985 = vmatprep.subr.mxu0 0.0
      %986 = vmatpush1.msra.mxu0 0.0
      %987 = vmatprep.subr.mxu0 0.0
      %988 = vmatpush1.msra.mxu0 0.0
      %989 = vmatprep.subr.mxu0 0.0
      %990 = vmatpush1.msra.mxu0 0.0
      %991 = vmatprep.subr.mxu0 0.0
      %992 = vmatpush1.msra.mxu0 0.0
      %993 = vmatprep.subr.mxu0 0.0
      %994 = vmatpush1.msra.mxu0 0.0
      %995 = vmatprep.subr.mxu0 0.0
      %996 = vmatpush1.msra.mxu0 0.0
      %997 = vmatprep.subr.mxu0 0.0
      %998 = vmatpush1.msra.mxu0 0.0
      %999 = vmatprep.subr.mxu0 0.0
      %1000 = vmatpush1.msra.mxu0 0.0
      %1001 = vmatprep.subr.mxu0 0.0
      %1002 = vmatpush1.msra.mxu0 0.0
      %1003 = vmatprep.subr.mxu0 0.0
      %1004 = vmatpush1.msra.mxu0 0.0
      %1005 = vmatprep.subr.mxu0 0.0
      %1006 = vmatpush1.msra.mxu0 0.0
      %1007 = vmatprep.subr.mxu0 0.0
      %1008 = vmatpush1.msra.mxu0 0.0
      %1009 = vmatprep.subr.mxu0 0.0
      %1010 = vmatpush1.msra.mxu0 0.0
      %1011 = vmatprep.subr.mxu0 0.0
      %1012 = vmatpush1.msra.mxu0 0.0
      %1013 = vmatprep.mubr.f32.mxu0 0.0
      %1014 = vmatmul.mubr.f32.gmra.mrb[0].mxu0 %v947
      %v1015 = vpop.f32.mrb[0].mxu0
      %v1016 = vadd.f32 0.0, %v1015
      %v1017 = vpop.f32.mrb[0].mxu0
      %1018 = vdwg.mxu0
      %v1019 = vadd.f32 %v923, %v1016
      %v1020 = vld [vmem:[%s6 + $0x60] sm:$0xff]
      %v1021 = vld [vmem:[%s6 + $0x68] sm:$0xff]
      %v1022 = vld [vmem:[%s6 + $0x70] sm:$0xff]
      %v1023 = vld [vmem:[%s6 + $0x78] sm:$0xff]
      %v1026 = vcombine.low %v749, %v750
      %v1028 = vunpack.c.l.s4 1966171168
      %v1029 = vunpack.c.0.s8 %v1028
      %v1030 = vlaneseq
      %v1031 = vshrl.u32 %v1030, 7
      %v1032 = vsub.s32 %v1029, %v1031
      %v1033 = vrot.slane %v1026, %v1032
      %v1035 = vunpack.c.l.s4 1966171168
      %v1036 = vunpack.c.0.s8 %v1035
      %v1037 = vlaneseq
      %v1038 = vshrl.u32 %v1037, 7
      %v1039 = vsub.s32 %v1036, %v1038
      %v1040 = vrot.slane %v1033, %v1039
      %v1041 = vsel %vm764, %v1040, 0
      %1043 = vmatprep.subr.mxu0 0.0
      %1044 = vmatpush1.msra.mxu0 %v1020
      %1045 = vmatprep.subr.mxu0 0.0
      %1046 = vmatpush1.msra.mxu0 %v1021
      %1047 = vmatprep.subr.mxu0 0.0
      %1048 = vmatpush1.msra.mxu0 %v1022
      %1049 = vmatprep.subr.mxu0 0.0
      %1050 = vmatpush1.msra.mxu0 %v1023
      %1051 = vmatprep.subr.mxu0 0.0
      %1052 = vmatpush1.msra.mxu0 0.0
      %1053 = vmatprep.subr.mxu0 0.0
      %1054 = vmatpush1.msra.mxu0 0.0
      %1055 = vmatprep.subr.mxu0 0.0
      %1056 = vmatpush1.msra.mxu0 0.0
      %1057 = vmatprep.subr.mxu0 0.0
      %1058 = vmatpush1.msra.mxu0 0.0
      %1059 = vmatprep.subr.mxu0 0.0
      %1060 = vmatpush1.msra.mxu0 0.0
      %1061 = vmatprep.subr.mxu0 0.0
      %1062 = vmatpush1.msra.mxu0 0.0
      %1063 = vmatprep.subr.mxu0 0.0
      %1064 = vmatpush1.msra.mxu0 0.0
      %1065 = vmatprep.subr.mxu0 0.0
      %1066 = vmatpush1.msra.mxu0 0.0
      %1067 = vmatprep.subr.mxu0 0.0
      %1068 = vmatpush1.msra.mxu0 0.0
      %1069 = vmatprep.subr.mxu0 0.0
      %1070 = vmatpush1.msra.mxu0 0.0
      %1071 = vmatprep.subr.mxu0 0.0
      %1072 = vmatpush1.msra.mxu0 0.0
      %1073 = vmatprep.subr.mxu0 0.0
      %1074 = vmatpush1.msra.mxu0 0.0
      %1075 = vmatprep.subr.mxu0 0.0
      %1076 = vmatpush1.msra.mxu0 0.0
      %1077 = vmatprep.subr.mxu0 0.0
      %1078 = vmatpush1.msra.mxu0 0.0
      %1079 = vmatprep.subr.mxu0 0.0
      %1080 = vmatpush1.msra.mxu0 0.0
      %1081 = vmatprep.subr.mxu0 0.0
      %1082 = vmatpush1.msra.mxu0 0.0
      %1083 = vmatprep.subr.mxu0 0.0
      %1084 = vmatpush1.msra.mxu0 0.0
      %1085 = vmatprep.subr.mxu0 0.0
      %1086 = vmatpush1.msra.mxu0 0.0
      %1087 = vmatprep.subr.mxu0 0.0
      %1088 = vmatpush1.msra.mxu0 0.0
      %1089 = vmatprep.subr.mxu0 0.0
      %1090 = vmatpush1.msra.mxu0 0.0
      %1091 = vmatprep.subr.mxu0 0.0
      %1092 = vmatpush1.msra.mxu0 0.0
      %1093 = vmatprep.subr.mxu0 0.0
      %1094 = vmatpush1.msra.mxu0 0.0
      %1095 = vmatprep.subr.mxu0 0.0
      %1096 = vmatpush1.msra.mxu0 0.0
      %1097 = vmatprep.subr.mxu0 0.0
      %1098 = vmatpush1.msra.mxu0 0.0
      %1099 = vmatprep.subr.mxu0 0.0
      %1100 = vmatpush1.msra.mxu0 0.0
      %1101 = vmatprep.subr.mxu0 0.0
      %1102 = vmatpush1.msra.mxu0 0.0
      %1103 = vmatprep.subr.mxu0 0.0
      %1104 = vmatpush1.msra.mxu0 0.0
      %1105 = vmatprep.subr.mxu0 0.0
      %1106 = vmatpush1.msra.mxu0 0.0
      %1107 = vmatprep.mubr.f32.mxu0 0.0
      %1108 = vmatmul.mubr.f32.gmra.mrb[0].mxu0 %v1041
      %v1109 = vpop.f32.mrb[0].mxu0
      %v1110 = vadd.f32 0.0, %v1109
      %v1111 = vpop.f32.mrb[0].mxu0
      %1112 = vdwg.mxu0
      %v1113 = vadd.f32 %v1019, %v1110
      %v1114 = vld [vmem:[%s7] sm:$0x1]
      %v1116 = vlaneseq
      %v1117 = vshrl.u32 %v1116, 7
      %v1118 = vsub.s32 0, %v1117
      %v1119 = vrot.slane %v1114, %v1118
      %v1121 = vadd.f32 %v1113, %v1119
      %v1122 = vld [vmem:[%s8] sm:$0xff]
      %v1123 = vld [vmem:[%s8 + $0x8] sm:$0xff]
      %v1124 = vld [vmem:[%s8 + $0x10] sm:$0xff]
      %v1125 = vld [vmem:[%s8 + $0x18] sm:$0xff]
      %v1126 = vld [vmem:[%s8 + $0x20] sm:$0xff]
      %v1127 = vld [vmem:[%s8 + $0x28] sm:$0xff]
      %v1128 = vld [vmem:[%s8 + $0x30] sm:$0xff]
      %v1129 = vld [vmem:[%s8 + $0x38] sm:$0xff]
      %v1130 = vrot.slane %v743, 1
      %v1131 = vsel %vm762, %v744, %v1130
      %v1132 = vsel %vm764, %v1131, 0
      %1134 = vmatprep.subr.mxu0 0.0
      %1135 = vmatpush1.msra.mxu0 %v1126
      %1136 = vmatprep.subr.mxu0 0.0
      %1137 = vmatpush1.msra.mxu0 %v1127
      %1138 = vmatprep.subr.mxu0 0.0
      %1139 = vmatpush1.msra.mxu0 %v1128
      %1140 = vmatprep.subr.mxu0 0.0
      %1141 = vmatpush1.msra.mxu0 %v1129
      %1142 = vmatprep.subr.mxu0 0.0
      %1143 = vmatpush1.msra.mxu0 0.0
      %1144 = vmatprep.subr.mxu0 0.0
      %1145 = vmatpush1.msra.mxu0 0.0
      %1146 = vmatprep.subr.mxu0 0.0
      %1147 = vmatpush1.msra.mxu0 0.0
      %1148 = vmatprep.subr.mxu0 0.0
      %1149 = vmatpush1.msra.mxu0 0.0
      %1150 = vmatprep.subr.mxu0 0.0
      %1151 = vmatpush1.msra.mxu0 0.0
      %1152 = vmatprep.subr.mxu0 0.0
      %1153 = vmatpush1.msra.mxu0 0.0
      %1154 = vmatprep.subr.mxu0 0.0
      %1155 = vmatpush1.msra.mxu0 0.0
      %1156 = vmatprep.subr.mxu0 0.0
      %1157 = vmatpush1.msra.mxu0 0.0
      %1158 = vmatprep.subr.mxu0 0.0
      %1159 = vmatpush1.msra.mxu0 0.0
      %1160 = vmatprep.subr.mxu0 0.0
      %1161 = vmatpush1.msra.mxu0 0.0
      %1162 = vmatprep.subr.mxu0 0.0
      %1163 = vmatpush1.msra.mxu0 0.0
      %1164 = vmatprep.subr.mxu0 0.0
      %1165 = vmatpush1.msra.mxu0 0.0
      %1166 = vmatprep.subr.mxu0 0.0
      %1167 = vmatpush1.msra.mxu0 0.0
      %1168 = vmatprep.subr.mxu0 0.0
      %1169 = vmatpush1.msra.mxu0 0.0
      %1170 = vmatprep.subr.mxu0 0.0
      %1171 = vmatpush1.msra.mxu0 0.0
      %1172 = vmatprep.subr.mxu0 0.0
      %1173 = vmatpush1.msra.mxu0 0.0
      %1174 = vmatprep.subr.mxu0 0.0
      %1175 = vmatpush1.msra.mxu0 0.0
      %1176 = vmatprep.subr.mxu0 0.0
      %1177 = vmatpush1.msra.mxu0 0.0
      %1178 = vmatprep.subr.mxu0 0.0
      %1179 = vmatpush1.msra.mxu0 0.0
      %1180 = vmatprep.subr.mxu0 0.0
      %1181 = vmatpush1.msra.mxu0 0.0
      %1182 = vmatprep.subr.mxu0 0.0
      %1183 = vmatpush1.msra.mxu0 0.0
      %1184 = vmatprep.subr.mxu0 0.0
      %1185 = vmatpush1.msra.mxu0 0.0
      %1186 = vmatprep.subr.mxu0 0.0
      %1187 = vmatpush1.msra.mxu0 0.0
      %1188 = vmatprep.subr.mxu0 0.0
      %1189 = vmatpush1.msra.mxu0 0.0
      %1190 = vmatprep.subr.mxu0 0.0
      %1191 = vmatpush1.msra.mxu0 0.0
      %1192 = vmatprep.subr.mxu0 0.0
      %1193 = vmatpush1.msra.mxu0 0.0
      %1194 = vmatprep.subr.mxu0 0.0
      %1195 = vmatpush1.msra.mxu0 0.0
      %1196 = vmatprep.subr.mxu0 0.0
      %1197 = vmatpush1.msra.mxu0 0.0
      %1198 = vmatprep.mubr.f32.mxu0 0.0
      %1199 = vmatmul.mubr.f32.gmra.mrb[0].mxu0 %v1132
      %v1200 = vpop.f32.mrb[0].mxu0
      %v1201 = vadd.f32 0.0, %v1200
      %v1202 = vpop.f32.mrb[0].mxu0
      %1203 = vdwg.mxu0
      %v1205 = vsel %vm764, %v1121, 0
      %1207 = vmatprep.subr.mxu0 0.0
      %1208 = vmatpush1.msra.mxu0 %v1122
      %1209 = vmatprep.subr.mxu0 0.0
      %1210 = vmatpush1.msra.mxu0 %v1123
      %1211 = vmatprep.subr.mxu0 0.0
      %1212 = vmatpush1.msra.mxu0 %v1124
      %1213 = vmatprep.subr.mxu0 0.0
      %1214 = vmatpush1.msra.mxu0 %v1125
      %1215 = vmatprep.subr.mxu0 0.0
      %1216 = vmatpush1.msra.mxu0 0.0
      %1217 = vmatprep.subr.mxu0 0.0
      %1218 = vmatpush1.msra.mxu0 0.0
      %1219 = vmatprep.subr.mxu0 0.0
      %1220 = vmatpush1.msra.mxu0 0.0
      %1221 = vmatprep.subr.mxu0 0.0
      %1222 = vmatpush1.msra.mxu0 0.0
      %1223 = vmatprep.subr.mxu0 0.0
      %1224 = vmatpush1.msra.mxu0 0.0
      %1225 = vmatprep.subr.mxu0 0.0
      %1226 = vmatpush1.msra.mxu0 0.0
      %1227 = vmatprep.subr.mxu0 0.0
      %1228 = vmatpush1.msra.mxu0 0.0
      %1229 = vmatprep.subr.mxu0 0.0
      %1230 = vmatpush1.msra.mxu0 0.0
      %1231 = vmatprep.subr.mxu0 0.0
      %1232 = vmatpush1.msra.mxu0 0.0
      %1233 = vmatprep.subr.mxu0 0.0
      %1234 = vmatpush1.msra.mxu0 0.0
      %1235 = vmatprep.subr.mxu0 0.0
      %1236 = vmatpush1.msra.mxu0 0.0
      %1237 = vmatprep.subr.mxu0 0.0
      %1238 = vmatpush1.msra.mxu0 0.0
      %1239 = vmatprep.subr.mxu0 0.0
      %1240 = vmatpush1.msra.mxu0 0.0
      %1241 = vmatprep.subr.mxu0 0.0
      %1242 = vmatpush1.msra.mxu0 0.0
      %1243 = vmatprep.subr.mxu0 0.0
      %1244 = vmatpush1.msra.mxu0 0.0
      %1245 = vmatprep.subr.mxu0 0.0
      %1246 = vmatpush1.msra.mxu0 0.0
      %1247 = vmatprep.subr.mxu0 0.0
      %1248 = vmatpush1.msra.mxu0 0.0
      %1249 = vmatprep.subr.mxu0 0.0
      %1250 = vmatpush1.msra.mxu0 0.0
      %1251 = vmatprep.subr.mxu0 0.0
      %1252 = vmatpush1.msra.mxu0 0.0
      %1253 = vmatprep.subr.mxu0 0.0
      %1254 = vmatpush1.msra.mxu0 0.0
      %1255 = vmatprep.subr.mxu0 0.0
      %1256 = vmatpush1.msra.mxu0 0.0
      %1257 = vmatprep.subr.mxu0 0.0
      %1258 = vmatpush1.msra.mxu0 0.0
      %1259 = vmatprep.subr.mxu0 0.0
      %1260 = vmatpush1.msra.mxu0 0.0
      %1261 = vmatprep.subr.mxu0 0.0
      %1262 = vmatpush1.msra.mxu0 0.0
      %1263 = vmatprep.subr.mxu0 0.0
      %1264 = vmatpush1.msra.mxu0 0.0
      %1265 = vmatprep.subr.mxu0 0.0
      %1266 = vmatpush1.msra.mxu0 0.0
      %1267 = vmatprep.subr.mxu0 0.0
      %1268 = vmatpush1.msra.mxu0 0.0
      %1269 = vmatprep.subr.mxu0 0.0
      %1270 = vmatpush1.msra.mxu0 0.0
      %1271 = vmatprep.mubr.f32.mxu0 0.0
      %1272 = vmatmul.mubr.f32.gmra.mrb[0].mxu0 %v1205
      %v1273 = vpop.f32.mrb[0].mxu0
      %v1274 = vadd.f32 %v1201, %v1273
      %v1275 = vpop.f32.mrb[0].mxu0
      %1276 = vdwg.mxu0
      %v1277 = vld [vmem:[%s9] sm:$0x1]
      %v1279 = vlaneseq
      %v1280 = vshrl.u32 %v1279, 7
      %v1281 = vsub.s32 0, %v1280
      %v1282 = vrot.slane %v1277, %v1281
      %v1284 = vadd.f32 %v1274, %v1282
      %1285 = vst [vmem:[#allocation4] sm:$0x3] %v1284
    $region49: #{tpu_custom_call.1} parent=1 // pred_fallthru
      _
    // Predicated region
    $region50: #{tpu_custom_call.1} parent=1 // pred_check
      _
    $region51: #{tpu_custom_call.1} parent=1 // pred_check_branch
      %1287 = sbr.rel (0) target = $region53
    $region52: #{tpu_custom_call.1} parent=1 // pred_region
      %s1289 = ssub.s32 32, 32
      %1290 = vsyncadd [#allocation5], %s1289
      %s1292 = sshll.u32 [#allocation4], 4
      %s1293 = int_to_ptr.vmem [resolvable:$true] %s1292
      %1295 = dma.vmem_to_hbm [thread:$0]  %s1293, 32, %s10, [#allocation5]
    $region53: #{tpu_custom_call.1} parent=1 // pred_fallthru
      _
    // Predicated region
    $region54: #{tpu_custom_call.1} parent=1 // pred_check
      _
    $region55: #{tpu_custom_call.1} parent=1 // pred_check_branch
      %1297 = sbr.rel (0) target = $region57
    $region56: #{tpu_custom_call.1} parent=1 // pred_region
      %1298 = dma.done [#allocation5], 32
    $region57: #{tpu_custom_call.1} parent=1 // pred_fallthru
      _
    %1299 = vsyncpa [#allocation5], 1

</llo_original>
